<compile_context>
chip_gen: v7x
topology: tpu7x:2x2x1
jax: 0.10.0
libtpu: 0.0.40
codegen_flags: <defaults>
</compile_context>

<pallas_src>
import functools

import jax
import jax.numpy as jnp
from jax.experimental import pallas as pl
from jax.experimental.pallas import tpu as pltpu

BN_EPS = 1e-5
LANE = 128        # vreg lane width (last dim); feature dims pad to multiples of this
BATCH_ALIGN = 16  # bf16 matmul LHS packs 2 rows/sublane -> pad batch to 16, not 8


def _round_up(x, m):
    return (x + m - 1) // m * m


def _vmem_limit_bytes():
    """Generation-aware VMEM limit: ~3/4 of physical capacity (v5e/v6e: 128 MiB,
    v7x: 64 MiB) so large tiles are allowed on big-VMEM chips without risking
    OOM on v7x.  Falls back to a conservative default if the query fails."""
    cap = 128 * 1024 * 1024
    try:
        cap = int(getattr(pltpu.get_tpu_info(), "vmem_capacity_bytes", cap))
    except Exception:
        pass
    return max(32 * 1024 * 1024, (cap * 3) // 4)


def _choose_tm(batch):
    if batch <= 256:
        return _round_up(batch, BATCH_ALIGN)
    return 256  # good batch-tile size on v5e/v6e/v7x


def _choose_tn(n_pad):
    # prefer >=256-wide N feeds for v6e/v7x 256x256 MXUs; 128 is native on v5e
    for t in (512, 256, 128):
        if n_pad % t == 0:
            return min(t, n_pad)
    return n_pad


def _layer_vmem_estimate(tm, tn, k_pad, act_itemsize, has_prologue, has_stats, has_bias):
    est = 2 * tm * k_pad * act_itemsize      # double-buffered activation tile
    est += 2 * k_pad * tn * 2                # bf16 weight block (assume 2 buffers)
    est += 2 * tm * tn * 4                   # double-buffered f32 output tile
    vec = 0
    if has_prologue:
        vec += 2 * k_pad                     # incoming scale/shift
    if has_stats:
        vec += 6 * tn                        # gamma/beta in, scale/shift out, s1/s2 scratch
    if has_bias:
        vec += tn
    return est + 2 * vec * 4


def _build_layer_kernel(*, has_prologue, has_stats, has_bias, batch_real, tm):
    """One layer: [BN-apply + ReLU of the previous layer] -> Linear -> [BN statistics].

    Grid = (feature_tiles, batch_tiles); batch is the inner ("arbitrary") axis when
    statistics accumulate, so s1/s2 scratch accumulates a full batch sweep per
    feature tile (standard accumulator pattern, megacore-safe)."""
    inv_b = 1.0 / float(batch_real)

    def kernel(*refs):
        it = iter(refs)
        act_ref = next(it)
        if has_prologue:
            sc_in, sh_in = next(it), next(it)
        w_ref = next(it)
        if has_stats:
            g_ref, be_ref = next(it), next(it)
        b_ref = next(it) if has_bias else None
        y_ref = next(it)
        if has_stats:
            scale_out, shift_out = next(it), next(it)
            s1, s2 = next(it), next(it)

        b_id = pl.program_id(1)

        if has_stats:
            @pl.when(b_id == 0)
            def _():
                s1[...] = jnp.zeros_like(s1)
                s2[...] = jnp.zeros_like(s2)

        if has_prologue:
            # BN(scale/shift) + ReLU epilogue of the previous layer, fused here so the
            # bf16 hidden activation h never round-trips HBM.
            h = jnp.maximum(act_ref[...] * sc_in[...] + sh_in[...], 0.0)
            if has_stats:
                # zero padded batch rows so this layer's batch statistics stay exact
                row = jax.lax.broadcasted_iota(jnp.int32, (tm, 1), 0) + b_id * tm
                h = jnp.where(row < batch_real, h, 0.0)
            h = h.astype(jnp.bfloat16)
        else:
            h = act_ref[...]  # already bf16; padded rows/cols are exactly zero

        y = jnp.dot(h, w_ref[...], preferred_element_type=jnp.float32)
        if has_bias:
            y = y + b_ref[...]
        y_ref[...] = y.astype(y_ref.dtype)

        if has_stats:
            s1[...] += jnp.sum(y, axis=0, keepdims=True)
            s2[...] += jnp.sum(y * y, axis=0, keepdims=True)

            @pl.when(b_id == pl.num_programs(1) - 1)
            def _():
                mean = s1[...] * inv_b
                # One-pass E[y^2]-E[y]^2 in f32, accumulated from the f32 MXU result.
                # TODO(synk): switch to centered/Welford accumulation if activations
                # can have |mean| >> std (catastrophic-cancellation risk).
                var = s2[...] * inv_b - mean * mean
                scale = g_ref[...] * jax.lax.rsqrt(var + BN_EPS)
                scale_out[...] = scale
                shift_out[...] = be_ref[...] - mean * scale

    return kernel


def _layer_forward(act, scale_in, shift_in, w, gamma, beta, bias, *,
                   batch_real, tm, tn, vmem_limit):
    has_prologue = scale_in is not None
    has_stats = gamma is not None
    has_bias = bias is not None

    b_pad, k_pad = act.shape
    n_pad = w.shape[1]
    n_tiles = n_pad // tn
    b_tiles = b_pad // tm

    kernel = _build_layer_kernel(has_prologue=has_prologue, has_stats=has_stats,
                                 has_bias=has_bias, batch_real=batch_real, tm=tm)

    in_specs = [pl.BlockSpec((tm, k_pad), lambda n, b: (b, 0))]
    inputs = [act]
    if has_prologue:
        vec_k = pl.BlockSpec((1, k_pad), lambda n, b: (0, 0))
        in_specs += [vec_k, vec_k]
        inputs += [scale_in, shift_in]
    # Constant-over-batch index map: the weight tile is fetched once per feature tile
    # and stays VMEM-resident while activation tiles stream through.
    # TODO(synk): pin to a single buffer (pipeline_mode=pl.Buffered(1)) if the compiler
    # ever double-buffers this constant-index block on VMEM-tight shapes.
    in_specs.append(pl.BlockSpec((k_pad, tn), lambda n, b: (0, n)))
    inputs.append(w)
    vec_n = pl.BlockSpec((1, tn), lambda n, b: (0, n))
    if has_stats:
        in_specs += [vec_n, vec_n]
        inputs += [gamma, beta]
    if has_bias:
        in_specs.append(vec_n)
        inputs.append(bias)

    out_specs = [pl.BlockSpec((tm, tn), lambda n, b: (b, n))]
    # y kept f32 between layers so the BN apply in the next kernel stays full precision.
    out_shapes = [jax.ShapeDtypeStruct((b_pad, n_pad), jnp.float32)]
    if has_stats:
        out_specs += [vec_n, vec_n]
        out_shapes += [jax.ShapeDtypeStruct((1, n_pad), jnp.float32)] * 2

    scratch = [pltpu.VMEM((1, tn), jnp.float32)] * 2 if has_stats else []

    # Batch axis accumulates BN statistics into VMEM scratch -> must be sequential
    # ("arbitrary"); the feature-tile axis is embarrassingly parallel, which lets
    # v7x shard it across both TensorCores.  The final Linear has no stats, so both
    # axes are parallel there.
    semantics = ("parallel", "arbitrary") if has_stats else ("parallel", "parallel")

    cost = pl.CostEstimate(
        flops=2 * b_pad * k_pad * n_pad,
        transcendentals=n_pad if has_stats else 0,
        bytes_accessed=int(act.size * act.dtype.itemsize * n_tiles
                           + w.size * w.dtype.itemsize
                           + b_pad * n_pad * 4),
    )

    out = pl.pallas_call(
        kernel,
        out_shape=tuple(out_shapes),
        grid_spec=pltpu.PrefetchScalarGridSpec(
            num_scalar_prefetch=0,
            grid=(n_tiles, b_tiles),
            in_specs=in_specs,
            out_specs=tuple(out_specs),
            scratch_shapes=scratch,
        ),
        compiler_params=pltpu.CompilerParams(
            dimension_semantics=semantics,
            vmem_limit_bytes=vmem_limit,
        ),
        cost_estimate=cost,
    )(*inputs)

    if has_stats:
        y, sc, sh = out
        return y, sc, sh
    return out[0]


def init_mlp_params(key, num_layers, input_dim, hidden_dim, output_dim):
    """Deterministic init mimicking nn.Linear default (uniform +/- 1/sqrt(fan_in))
    and nn.BatchNorm1d (gamma=1, beta=0). Weights stored PyTorch-style (out, in)."""
    if num_layers < 1:
        raise ValueError("number of layers should be positive!")
    params = {"linears": [], "bns": []}
    if num_layers == 1:
        dims = [(input_dim, output_dim)]
    else:
        dims = [(input_dim, hidden_dim)]
        dims += [(hidden_dim, hidden_dim)] * (num_layers - 2)
        dims += [(hidden_dim, output_dim)]
    for (fan_in, fan_out) in dims:
        key, kw, kb = jax.random.split(key, 3)
        bound = 1.0 / jnp.sqrt(fan_in)
        w = jax.random.uniform(kw, (fan_out, fan_in), jnp.float32, -bound, bound)
        b = jax.random.uniform(kb, (1, fan_out), jnp.float32, -bound, bound)
        params["linears"].append((w, b))
    for _ in range(num_layers - 1):
        params["bns"].append(
            (jnp.ones((1, hidden_dim), jnp.float32), jnp.zeros((1, hidden_dim), jnp.float32))
        )
    return params


def prepare_params(params, num_layers, input_dim, hidden_dim, output_dim):
    """One-time prep: pad feature dims to multiples of 128, pre-transpose weights to
    (in, out), cast weights to bf16.  Padding is zero (gamma padded with zero keeps
    fake feature columns identically zero through BN + ReLU)."""
    in_pad = _round_up(input_dim, LANE)
    out_pad = _round_up(output_dim, LANE)
    layers = []
    if num_layers == 1:
        w, b = params["linears"][0]
        wt = jnp.zeros((in_pad, out_pad), jnp.float32).at[:input_dim, :output_dim].set(w.T)
        bp = jnp.zeros((1, out_pad), jnp.float32).at[:, :output_dim].set(b)
        return [{"w": wt.astype(jnp.bfloat16), "bias": bp}]

    hid_pad = _round_up(hidden_dim, LANE)
    for layer in range(num_layers - 1):
        w, _b = params["linears"][layer]      # hidden-layer bias is a no-op before BN
        gamma, beta = params["bns"][layer]
        fan_in = input_dim if layer == 0 else hidden_dim
        fin_pad = in_pad if layer == 0 else hid_pad
        wt = jnp.zeros((fin_pad, hid_pad), jnp.float32).at[:fan_in, :hidden_dim].set(w.T)
        gp = jnp.zeros((1, hid_pad), jnp.float32).at[:, :hidden_dim].set(gamma)
        bp = jnp.zeros((1, hid_pad), jnp.float32).at[:, :hidden_dim].set(beta)
        layers.append({"w": wt.astype(jnp.bfloat16), "gamma": gp, "beta": bp})

    w, b = params["linears"][num_layers - 1]
    wt = jnp.zeros((hid_pad, out_pad), jnp.float32).at[:hidden_dim, :output_dim].set(w.T)
    bp = jnp.zeros((1, out_pad), jnp.float32).at[:, :output_dim].set(b)
    layers.append({"w": wt.astype(jnp.bfloat16), "bias": bp})
    return layers


@functools.partial(jax.jit, static_argnames=("output_dim",))
def mlp_forward(layer_params, x, output_dim):
    """Forward pass. layer_params comes from prepare_params()."""
    B, input_dim = x.shape
    in_pad = layer_params[0]["w"].shape[0]

    vmem_limit = _vmem_limit_bytes()
    budget = int(vmem_limit * 0.85)

    tm = _choose_tm(B)
    b_pad = _round_up(B, tm)

    # Pad AND cast to bf16 once in the wrapper (half the input HBM traffic of an f32
    # pad); padded rows/cols are exactly zero so layer-0 statistics stay exact.
    x_p = jnp.zeros((b_pad, in_pad), jnp.bfloat16).at[:B, :input_dim].set(
        x.astype(jnp.bfloat16))

    act = x_p
    scale = shift = None
    out_full = None
    for li, lp in enumerate(layer_params):
        is_last = li == len(layer_params) - 1
        k_pad = act.shape[1]
        n_pad = lp["w"].shape[1]
        tn = _choose_tn(n_pad)
        while tn > 128 and _layer_vmem_estimate(
                tm, tn, k_pad, act.dtype.itemsize,
                scale is not None, not is_last, is_last) > budget:
            tn //= 2
        # TODO(synk): if a full-K activation slab still exceeds the VMEM budget (very
        # large hidden dims), add a K grid axis with partial-sum accumulation.
        if is_last:
            out_full = _layer_forward(
                act, scale, shift, lp["w"], None, None, lp["bias"],
                batch_real=B, tm=tm, tn=tn, vmem_limit=vmem_limit)
        else:
            act, scale, shift = _layer_forward(
                act, scale, shift, lp["w"], lp["gamma"], lp["beta"], None,
                batch_real=B, tm=tm, tn=tn, vmem_limit=vmem_limit)
    return out_full[:B, :output_dim]


# ------------------------- references (pure JAX, no Pallas) -------------------------

def mlp_reference(params, x, num_layers):
    """Pure-f32 reference with exact PyTorch forward semantics (training-mode BN)."""
    if num_layers == 1:
        w, b = params["linears"][0]
        return x @ w.T + b
    h = x
    for layer in range(num_layers - 1):
        w, b = params["linears"][layer]
        gamma, beta = params["bns"][layer]
        y = h @ w.T + b
        mean = jnp.mean(y, axis=0, keepdims=True)
        var = jnp.mean((y - mean) ** 2, axis=0, keepdims=True)
        h = jnp.maximum((y - mean) / jnp.sqrt(var + BN_EPS) * gamma + beta, 0.0)
    w, b = params["linears"][num_layers - 1]
    return h @ w.T + b


def mlp_reference_matched(params, x, num_layers):
    """Reference matching the kernel's arithmetic (bf16 matmul operands, f32 accum,
    one-pass stats, bias dropped before BN) for a tight-tolerance check."""
    def bdot(a, w):
        return jnp.dot(a.astype(jnp.bfloat16), w.T.astype(jnp.bfloat16),
                       preferred_element_type=jnp.float32)
    if num_layers == 1:
        w, b = params["linears"][0]
        return bdot(x, w) + b
    h = x.astype(jnp.float32)
    n = x.shape[0]
    for layer in range(num_layers - 1):
        w, _b = params["linears"][layer]
        gamma, beta = params["bns"][layer]
        y = bdot(h, w)
        mean = jnp.sum(y, axis=0, keepdims=True) / n
        var = jnp.sum(y * y, axis=0, keepdims=True) / n - mean * mean
        scale = gamma * jax.lax.rsqrt(var + BN_EPS)
        shift = beta - mean * scale
        h = jnp.maximum(y * scale + shift, 0.0)
    w, b = params["linears"][num_layers - 1]
    return bdot(h, w) + b


if __name__ == "__main__":
    num_layers = 3
    input_dim = 16
    hidden_dim = 32
    output_dim = 10
    batch = 8

    key = jax.random.PRNGKey(0)
    key, kx, kx2, kx3, k1 = jax.random.split(key, 5)
    x = jax.random.normal(kx, (batch, input_dim), jnp.float32)
    params = init_mlp_params(key, num_layers, input_dim, hidden_dim, output_dim)
    layers = prepare_params(params, num_layers, input_dim, hidden_dim, output_dim)

    # --- main check: 3-layer MLP ---
    out = jax.block_until_ready(mlp_forward(layers, x, output_dim))
    assert out.shape == (batch, output_dim)
    ref_m = mlp_reference_matched(params, x, num_layers)
    assert jnp.allclose(out, ref_m, atol=1e-3, rtol=1e-3), "mismatch vs matched-precision ref"
    ref_f32 = mlp_reference(params, x, num_layers)
    assert float(jnp.max(jnp.abs(out - ref_f32))) < 1e-1, "gross mismatch vs f32 reference"

    # --- ragged batch (exercises batch padding + padded-row masking in BN stats) ---
    x2 = jax.random.normal(kx2, (6, input_dim), jnp.float32)
    out2 = jax.block_until_ready(mlp_forward(layers, x2, output_dim))
    assert out2.shape == (6, output_dim)
    assert jnp.allclose(out2, mlp_reference_matched(params, x2, num_layers),
                        atol=1e-3, rtol=1e-3), "ragged-batch mismatch"

    # --- multi-tile batch (exercises cross-tile BN stats accumulation + last-tile mask) ---
    x3 = jax.random.normal(kx3, (300, input_dim), jnp.float32)
    out3 = jax.block_until_ready(mlp_forward(layers, x3, output_dim))
    assert out3.shape == (300, output_dim)
    assert jnp.allclose(out3, mlp_reference_matched(params, x3, num_layers),
                        atol=5e-3, rtol=5e-3), "multi-tile batch mismatch"

    # --- num_layers == 1 (pure linear) path ---
    params1 = init_mlp_params(k1, 1, input_dim, hidden_dim, output_dim)
    layers1 = prepare_params(params1, 1, input_dim, hidden_dim, output_dim)
    out1 = jax.block_until_ready(mlp_forward(layers1, x, output_dim))
    assert jnp.allclose(out1, mlp_reference_matched(params1, x, 1),
                        atol=1e-3, rtol=1e-3), "linear-only mismatch"

    print("KERNEL_OK")
</pallas_src>

<mosaic_0001>
module attributes {stable_mosaic.version = 11 : i64} {
  func.func @kernel(%arg0: i32, %arg1: i32, %arg2: memref<16x128xf32, #tpu.memory_space<vmem>>, %arg3: memref<1x128xf32, #tpu.memory_space<vmem>>, %arg4: memref<1x128xf32, #tpu.memory_space<vmem>>, %arg5: memref<128x128xbf16, #tpu.memory_space<vmem>>, %arg6: memref<1x128xf32, #tpu.memory_space<vmem>>, %arg7: memref<1x128xf32, #tpu.memory_space<vmem>>, %arg8: memref<16x128xf32, #tpu.memory_space<vmem>>, %arg9: memref<1x128xf32, #tpu.memory_space<vmem>>, %arg10: memref<1x128xf32, #tpu.memory_space<vmem>>, %arg11: memref<1x128xf32, #tpu.memory_space<vmem>>, %arg12: memref<1x128xf32, #tpu.memory_space<vmem>>) attributes {dimension_semantics = [#tpu.dimension_semantics<parallel>, #tpu.dimension_semantics<arbitrary>], iteration_bounds = array<i64: 1, 1>, scalar_prefetch = 0 : i64, scratch_operands = 2 : i64, tpu.core_type = #tpu.core_type<tc>, window_params = [{transform_indices = @transform_0, window_bounds = array<i64: 16, 128>}, {pipeline_mode = #tpu.pipeline_mode<synchronous>, transform_indices = @transform_1, window_bounds = array<i64: 1, 128>}, {pipeline_mode = #tpu.pipeline_mode<synchronous>, transform_indices = @transform_2, window_bounds = array<i64: 1, 128>}, {transform_indices = @transform_3, window_bounds = array<i64: 128, 128>}, {transform_indices = @transform_4, window_bounds = array<i64: 1, 128>}, {transform_indices = @transform_5, window_bounds = array<i64: 1, 128>}, {transform_indices = @transform_6, window_bounds = array<i64: 16, 128>}, {transform_indices = @transform_7, window_bounds = array<i64: 1, 128>}, {transform_indices = @transform_8, window_bounds = array<i64: 1, 128>}]} {
    %c0_i32 = arith.constant 0 : i32
    %0 = arith.cmpi eq, %arg1, %c0_i32 : i32
    %1 = arith.extui %0 : i1 to i32
    %c0_i32_0 = arith.constant 0 : i32
    %2 = arith.cmpi ne, %1, %c0_i32_0 : i32
    scf.if %2 {
      %cst_24 = arith.constant 0.000000e+00 : f32
      %40 = vector.broadcast %cst_24 : f32 to vector<1x128xf32>
      %c0_25 = arith.constant 0 : index
      %c0_26 = arith.constant 0 : index
      %41 = vector.load %arg11[%c0_25, %c0_26] : memref<1x128xf32, #tpu.memory_space<vmem>>, vector<1x128xf32>
      tpu.vector_store %arg11[%c0_25, %c0_26], %40 {strides = array<i32>} : memref<1x128xf32, #tpu.memory_space<vmem>>, vector<1x128xf32>,
      %cst_27 = arith.constant 0.000000e+00 : f32
      %42 = vector.broadcast %cst_27 : f32 to vector<1x128xf32>
      %c0_28 = arith.constant 0 : index
      %c0_29 = arith.constant 0 : index
      %43 = vector.load %arg12[%c0_28, %c0_29] : memref<1x128xf32, #tpu.memory_space<vmem>>, vector<1x128xf32>
      tpu.vector_store %arg12[%c0_28, %c0_29], %42 {strides = array<i32>} : memref<1x128xf32, #tpu.memory_space<vmem>>, vector<1x128xf32>,
    } else {
    }
    %c0 = arith.constant 0 : index
    %c0_1 = arith.constant 0 : index
    %3 = vector.load %arg2[%c0, %c0_1] : memref<16x128xf32, #tpu.memory_space<vmem>>, vector<16x128xf32>
    %c0_2 = arith.constant 0 : index
    %c0_3 = arith.constant 0 : index
    %4 = vector.load %arg3[%c0_2, %c0_3] : memref<1x128xf32, #tpu.memory_space<vmem>>, vector<1x128xf32>
    %5 = vector.broadcast %4 : vector<1x128xf32> to vector<16x128xf32>
    %6 = arith.mulf %3, %5 : vector<16x128xf32>
    %c0_4 = arith.constant 0 : index
    %c0_5 = arith.constant 0 : index
    %7 = vector.load %arg4[%c0_4, %c0_5] : memref<1x128xf32, #tpu.memory_space<vmem>>, vector<1x128xf32>
    %8 = vector.broadcast %7 : vector<1x128xf32> to vector<16x128xf32>
    %9 = arith.addf %6, %8 : vector<16x128xf32>
    %cst = arith.constant 0.000000e+00 : f32
    %10 = vector.broadcast %cst : f32 to vector<16x128xf32>
    %11 = arith.maximumf %9, %10 : vector<16x128xf32>
    %12 = tpu.iota {dimensions = array<i32: 0>} : vector<16x1xi32>
    %c16_i32 = arith.constant 16 : i32
    %13 = arith.muli %arg1, %c16_i32 : i32
    %14 = vector.broadcast %13 : i32 to vector<16x1xi32>
    %15 = arith.addi %12, %14 : vector<16x1xi32>
    %c8_i32 = arith.constant 8 : i32
    %16 = vector.broadcast %c8_i32 : i32 to vector<16x1xi32>
    %17 = arith.cmpi slt, %15, %16 : vector<16x1xi32>
    %cst_6 = arith.constant 0.000000e+00 : f32
    %18 = vector.shape_cast %17 : vector<16x1xi1> to vector<16x1xi1>
    %19 = vector.broadcast %18 : vector<16x1xi1> to vector<16x128xi1>
    %20 = vector.broadcast %cst_6 : f32 to vector<16x128xf32>
    %21 = arith.select %19, %11, %20 : vector<16x128xi1>, vector<16x128xf32>
    %22 = arith.truncf %21 : vector<16x128xf32> to vector<16x128xbf16>
    %c0_7 = arith.constant 0 : index
    %c0_8 = arith.constant 0 : index
    %23 = vector.load %arg5[%c0_7, %c0_8] : memref<128x128xbf16, #tpu.memory_space<vmem>>, vector<128x128xbf16>
    %cst_9 = arith.constant dense<0.000000e+00> : vector<16x128xf32>
    %24 = tpu.matmul %22, %23, %cst_9 {dimension_numbers = #tpu.dot_dimension_numbers<[1], [0], [0], [1], [0, 0, 1, 1], [], []>} : vector<16x128xbf16>, vector<128x128xbf16>, vector<16x128xf32> -> vector<16x128xf32>
    %c0_10 = arith.constant 0 : index
    %c0_11 = arith.constant 0 : index
    %25 = vector.load %arg8[%c0_10, %c0_11] : memref<16x128xf32, #tpu.memory_space<vmem>>, vector<16x128xf32>
    tpu.vector_store %arg8[%c0_10, %c0_11], %24 {strides = array<i32>} : memref<16x128xf32, #tpu.memory_space<vmem>>, vector<16x128xf32>,
    %c0_12 = arith.constant 0 : index
    %c0_13 = arith.constant 0 : index
    %26 = vector.load %arg11[%c0_12, %c0_13] : memref<1x128xf32, #tpu.memory_space<vmem>>, vector<1x128xf32>
    %cst_14 = arith.constant dense<0.000000e+00> : vector<128xf32>
    %27 = vector.multi_reduction <add>, %24, %cst_14 [0] : vector<16x128xf32> to vector<128xf32>
    %28 = vector.shape_cast %27 : vector<128xf32> to vector<1x128xf32>
    %29 = arith.addf %26, %28 : vector<1x128xf32>
    %c0_15 = arith.constant 0 : index
    %c0_16 = arith.constant 0 : index
    %30 = vector.load %arg11[%c0_15, %c0_16] : memref<1x128xf32, #tpu.memory_space<vmem>>, vector<1x128xf32>
    tpu.vector_store %arg11[%c0_15, %c0_16], %29 {strides = array<i32>} : memref<1x128xf32, #tpu.memory_space<vmem>>, vector<1x128xf32>,
    %c0_17 = arith.constant 0 : index
    %c0_18 = arith.constant 0 : index
    %31 = vector.load %arg12[%c0_17, %c0_18] : memref<1x128xf32, #tpu.memory_space<vmem>>, vector<1x128xf32>
    %32 = arith.mulf %24, %24 : vector<16x128xf32>
    %cst_19 = arith.constant dense<0.000000e+00> : vector<128xf32>
    %33 = vector.multi_reduction <add>, %32, %cst_19 [0] : vector<16x128xf32> to vector<128xf32>
    %34 = vector.shape_cast %33 : vector<128xf32> to vector<1x128xf32>
    %35 = arith.addf %31, %34 : vector<1x128xf32>
    %c0_20 = arith.constant 0 : index
    %c0_21 = arith.constant 0 : index
    %36 = vector.load %arg12[%c0_20, %c0_21] : memref<1x128xf32, #tpu.memory_space<vmem>>, vector<1x128xf32>
    tpu.vector_store %arg12[%c0_20, %c0_21], %35 {strides = array<i32>} : memref<1x128xf32, #tpu.memory_space<vmem>>, vector<1x128xf32>,
    %c0_i32_22 = arith.constant 0 : i32
    %37 = arith.cmpi eq, %arg1, %c0_i32_22 : i32
    %38 = arith.extui %37 : i1 to i32
    %c0_i32_23 = arith.constant 0 : i32
    %39 = arith.cmpi ne, %38, %c0_i32_23 : i32
    scf.if %39 {
      %c0_24 = arith.constant 0 : index
      %c0_25 = arith.constant 0 : index
      %40 = vector.load %arg11[%c0_24, %c0_25] : memref<1x128xf32, #tpu.memory_space<vmem>>, vector<1x128xf32>
      %cst_26 = arith.constant 1.250000e-01 : f32
      %41 = vector.broadcast %cst_26 : f32 to vector<1x128xf32>
      %42 = arith.mulf %40, %41 : vector<1x128xf32>
      %c0_27 = arith.constant 0 : index
      %c0_28 = arith.constant 0 : index
      %43 = vector.load %arg12[%c0_27, %c0_28] : memref<1x128xf32, #tpu.memory_space<vmem>>, vector<1x128xf32>
      %cst_29 = arith.constant 1.250000e-01 : f32
      %44 = vector.broadcast %cst_29 : f32 to vector<1x128xf32>
      %45 = arith.mulf %43, %44 : vector<1x128xf32>
      %46 = arith.mulf %42, %42 : vector<1x128xf32>
      %47 = arith.subf %45, %46 : vector<1x128xf32>
      %c0_30 = arith.constant 0 : index
      %c0_31 = arith.constant 0 : index
      %48 = vector.load %arg6[%c0_30, %c0_31] : memref<1x128xf32, #tpu.memory_space<vmem>>, vector<1x128xf32>
      %cst_32 = arith.constant 9.99999974E-6 : f32
      %49 = vector.broadcast %cst_32 : f32 to vector<1x128xf32>
      %50 = arith.addf %47, %49 : vector<1x128xf32>
      %51 = math.rsqrt %50 : vector<1x128xf32>
      %52 = arith.mulf %48, %51 : vector<1x128xf32>
      %c0_33 = arith.constant 0 : index
      %c0_34 = arith.constant 0 : index
      %53 = vector.load %arg9[%c0_33, %c0_34] : memref<1x128xf32, #tpu.memory_space<vmem>>, vector<1x128xf32>
      tpu.vector_store %arg9[%c0_33, %c0_34], %52 {strides = array<i32>} : memref<1x128xf32, #tpu.memory_space<vmem>>, vector<1x128xf32>,
      %c0_35 = arith.constant 0 : index
      %c0_36 = arith.constant 0 : index
      %54 = vector.load %arg7[%c0_35, %c0_36] : memref<1x128xf32, #tpu.memory_space<vmem>>, vector<1x128xf32>
      %55 = arith.mulf %42, %52 : vector<1x128xf32>
      %56 = arith.subf %54, %55 : vector<1x128xf32>
      %c0_37 = arith.constant 0 : index
      %c0_38 = arith.constant 0 : index
      %57 = vector.load %arg10[%c0_37, %c0_38] : memref<1x128xf32, #tpu.memory_space<vmem>>, vector<1x128xf32>
      tpu.vector_store %arg10[%c0_37, %c0_38], %56 {strides = array<i32>} : memref<1x128xf32, #tpu.memory_space<vmem>>, vector<1x128xf32>,
    } else {
    }
    return
  }
  func.func @transform_0(%arg0: i32, %arg1: i32) -> (i32, i32) {
    %c0_i32 = arith.constant 0 : i32
    %c0_i32_0 = arith.constant 0 : i32
    return %arg1, %c0_i32 : i32, i32
  }
  func.func @transform_1(%arg0: i32, %arg1: i32) -> (i32, i32) {
    %c0_i32 = arith.constant 0 : i32
    %c0_i32_0 = arith.constant 0 : i32
    %c0_i32_1 = arith.constant 0 : i32
    return %c0_i32, %c0_i32_0 : i32, i32
  }
  func.func @transform_2(%arg0: i32, %arg1: i32) -> (i32, i32) {
    %c0_i32 = arith.constant 0 : i32
    %c0_i32_0 = arith.constant 0 : i32
    %c0_i32_1 = arith.constant 0 : i32
    return %c0_i32, %c0_i32_0 : i32, i32
  }
  func.func @transform_3(%arg0: i32, %arg1: i32) -> (i32, i32) {
    %c0_i32 = arith.constant 0 : i32
    %c0_i32_0 = arith.constant 0 : i32
    return %c0_i32, %arg0 : i32, i32
  }
  func.func @transform_4(%arg0: i32, %arg1: i32) -> (i32, i32) {
    %c0_i32 = arith.constant 0 : i32
    %c0_i32_0 = arith.constant 0 : i32
    return %c0_i32, %arg0 : i32, i32
  }
  func.func @transform_5(%arg0: i32, %arg1: i32) -> (i32, i32) {
    %c0_i32 = arith.constant 0 : i32
    %c0_i32_0 = arith.constant 0 : i32
    return %c0_i32, %arg0 : i32, i32
  }
  func.func @transform_6(%arg0: i32, %arg1: i32) -> (i32, i32) {
    %c0_i32 = arith.constant 0 : i32
    return %arg1, %arg0 : i32, i32
  }
  func.func @transform_7(%arg0: i32, %arg1: i32) -> (i32, i32) {
    %c0_i32 = arith.constant 0 : i32
    %c0_i32_0 = arith.constant 0 : i32
    return %c0_i32, %arg0 : i32, i32
  }
  func.func @transform_8(%arg0: i32, %arg1: i32) -> (i32, i32) {
    %c0_i32 = arith.constant 0 : i32
    %c0_i32_0 = arith.constant 0 : i32
    return %c0_i32, %arg0 : i32, i32
  }
}

module attributes {stable_mosaic.version = 11 : i64} {
  func.func @kernel(%arg0: i32, %arg1: i32, %arg2: memref<16x128xbf16, #tpu.memory_space<vmem>>, %arg3: memref<128x128xbf16, #tpu.memory_space<vmem>>, %arg4: memref<1x128xf32, #tpu.memory_space<vmem>>, %arg5: memref<1x128xf32, #tpu.memory_space<vmem>>, %arg6: memref<16x128xf32, #tpu.memory_space<vmem>>, %arg7: memref<1x128xf32, #tpu.memory_space<vmem>>, %arg8: memref<1x128xf32, #tpu.memory_space<vmem>>, %arg9: memref<1x128xf32, #tpu.memory_space<vmem>>, %arg10: memref<1x128xf32, #tpu.memory_space<vmem>>) attributes {dimension_semantics = [#tpu.dimension_semantics<parallel>, #tpu.dimension_semantics<arbitrary>], iteration_bounds = array<i64: 1, 1>, scalar_prefetch = 0 : i64, scratch_operands = 2 : i64, tpu.core_type = #tpu.core_type<tc>, window_params = [{transform_indices = @transform_0, window_bounds = array<i64: 16, 128>}, {transform_indices = @transform_1, window_bounds = array<i64: 128, 128>}, {transform_indices = @transform_2, window_bounds = array<i64: 1, 128>}, {transform_indices = @transform_3, window_bounds = array<i64: 1, 128>}, {transform_indices = @transform_4, window_bounds = array<i64: 16, 128>}, {transform_indices = @transform_5, window_bounds = array<i64: 1, 128>}, {transform_indices = @transform_6, window_bounds = array<i64: 1, 128>}]} {
    %c0_i32 = arith.constant 0 : i32
    %0 = arith.cmpi eq, %arg1, %c0_i32 : i32
    %1 = arith.extui %0 : i1 to i32
    %c0_i32_0 = arith.constant 0 : i32
    %2 = arith.cmpi ne, %1, %c0_i32_0 : i32
    scf.if %2 {
      %cst_18 = arith.constant 0.000000e+00 : f32
      %21 = vector.broadcast %cst_18 : f32 to vector<1x128xf32>
      %c0_19 = arith.constant 0 : index
      %c0_20 = arith.constant 0 : index
      %22 = vector.load %arg9[%c0_19, %c0_20] : memref<1x128xf32, #tpu.memory_space<vmem>>, vector<1x128xf32>
      tpu.vector_store %arg9[%c0_19, %c0_20], %21 {strides = array<i32>} : memref<1x128xf32, #tpu.memory_space<vmem>>, vector<1x128xf32>,
      %cst_21 = arith.constant 0.000000e+00 : f32
      %23 = vector.broadcast %cst_21 : f32 to vector<1x128xf32>
      %c0_22 = arith.constant 0 : index
      %c0_23 = arith.constant 0 : index
      %24 = vector.load %arg10[%c0_22, %c0_23] : memref<1x128xf32, #tpu.memory_space<vmem>>, vector<1x128xf32>
      tpu.vector_store %arg10[%c0_22, %c0_23], %23 {strides = array<i32>} : memref<1x128xf32, #tpu.memory_space<vmem>>, vector<1x128xf32>,
    } else {
    }
    %c0 = arith.constant 0 : index
    %c0_1 = arith.constant 0 : index
    %3 = vector.load %arg2[%c0, %c0_1] : memref<16x128xbf16, #tpu.memory_space<vmem>>, vector<16x128xbf16>
    %c0_2 = arith.constant 0 : index
    %c0_3 = arith.constant 0 : index
    %4 = vector.load %arg3[%c0_2, %c0_3] : memref<128x128xbf16, #tpu.memory_space<vmem>>, vector<128x128xbf16>
    %cst = arith.constant dense<0.000000e+00> : vector<16x128xf32>
    %5 = tpu.matmul %3, %4, %cst {dimension_numbers = #tpu.dot_dimension_numbers<[1], [0], [0], [1], [0, 0, 1, 1], [], []>} : vector<16x128xbf16>, vector<128x128xbf16>, vector<16x128xf32> -> vector<16x128xf32>
    %c0_4 = arith.constant 0 : index
    %c0_5 = arith.constant 0 : index
    %6 = vector.load %arg6[%c0_4, %c0_5] : memref<16x128xf32, #tpu.memory_space<vmem>>, vector<16x128xf32>
    tpu.vector_store %arg6[%c0_4, %c0_5], %5 {strides = array<i32>} : memref<16x128xf32, #tpu.memory_space<vmem>>, vector<16x128xf32>,
    %c0_6 = arith.constant 0 : index
    %c0_7 = arith.constant 0 : index
    %7 = vector.load %arg9[%c0_6, %c0_7] : memref<1x128xf32, #tpu.memory_space<vmem>>, vector<1x128xf32>
    %cst_8 = arith.constant dense<0.000000e+00> : vector<128xf32>
    %8 = vector.multi_reduction <add>, %5, %cst_8 [0] : vector<16x128xf32> to vector<128xf32>
    %9 = vector.shape_cast %8 : vector<128xf32> to vector<1x128xf32>
    %10 = arith.addf %7, %9 : vector<1x128xf32>
    %c0_9 = arith.constant 0 : index
    %c0_10 = arith.constant 0 : index
    %11 = vector.load %arg9[%c0_9, %c0_10] : memref<1x128xf32, #tpu.memory_space<vmem>>, vector<1x128xf32>
    tpu.vector_store %arg9[%c0_9, %c0_10], %10 {strides = array<i32>} : memref<1x128xf32, #tpu.memory_space<vmem>>, vector<1x128xf32>,
    %c0_11 = arith.constant 0 : index
    %c0_12 = arith.constant 0 : index
    %12 = vector.load %arg10[%c0_11, %c0_12] : memref<1x128xf32, #tpu.memory_space<vmem>>, vector<1x128xf32>
    %13 = arith.mulf %5, %5 : vector<16x128xf32>
    %cst_13 = arith.constant dense<0.000000e+00> : vector<128xf32>
    %14 = vector.multi_reduction <add>, %13, %cst_13 [0] : vector<16x128xf32> to vector<128xf32>
    %15 = vector.shape_cast %14 : vector<128xf32> to vector<1x128xf32>
    %16 = arith.addf %12, %15 : vector<1x128xf32>
    %c0_14 = arith.constant 0 : index
    %c0_15 = arith.constant 0 : index
    %17 = vector.load %arg10[%c0_14, %c0_15] : memref<1x128xf32, #tpu.memory_space<vmem>>, vector<1x128xf32>
    tpu.vector_store %arg10[%c0_14, %c0_15], %16 {strides = array<i32>} : memref<1x128xf32, #tpu.memory_space<vmem>>, vector<1x128xf32>,
    %c0_i32_16 = arith.constant 0 : i32
    %18 = arith.cmpi eq, %arg1, %c0_i32_16 : i32
    %19 = arith.extui %18 : i1 to i32
    %c0_i32_17 = arith.constant 0 : i32
    %20 = arith.cmpi ne, %19, %c0_i32_17 : i32
    scf.if %20 {
      %c0_18 = arith.constant 0 : index
      %c0_19 = arith.constant 0 : index
      %21 = vector.load %arg9[%c0_18, %c0_19] : memref<1x128xf32, #tpu.memory_space<vmem>>, vector<1x128xf32>
      %cst_20 = arith.constant 1.250000e-01 : f32
      %22 = vector.broadcast %cst_20 : f32 to vector<1x128xf32>
      %23 = arith.mulf %21, %22 : vector<1x128xf32>
      %c0_21 = arith.constant 0 : index
      %c0_22 = arith.constant 0 : index
      %24 = vector.load %arg10[%c0_21, %c0_22] : memref<1x128xf32, #tpu.memory_space<vmem>>, vector<1x128xf32>
      %cst_23 = arith.constant 1.250000e-01 : f32
      %25 = vector.broadcast %cst_23 : f32 to vector<1x128xf32>
      %26 = arith.mulf %24, %25 : vector<1x128xf32>
      %27 = arith.mulf %23, %23 : vector<1x128xf32>
      %28 = arith.subf %26, %27 : vector<1x128xf32>
      %c0_24 = arith.constant 0 : index
      %c0_25 = arith.constant 0 : index
      %29 = vector.load %arg4[%c0_24, %c0_25] : memref<1x128xf32, #tpu.memory_space<vmem>>, vector<1x128xf32>
      %cst_26 = arith.constant 9.99999974E-6 : f32
      %30 = vector.broadcast %cst_26 : f32 to vector<1x128xf32>
      %31 = arith.addf %28, %30 : vector<1x128xf32>
      %32 = math.rsqrt %31 : vector<1x128xf32>
      %33 = arith.mulf %29, %32 : vector<1x128xf32>
      %c0_27 = arith.constant 0 : index
      %c0_28 = arith.constant 0 : index
      %34 = vector.load %arg7[%c0_27, %c0_28] : memref<1x128xf32, #tpu.memory_space<vmem>>, vector<1x128xf32>
      tpu.vector_store %arg7[%c0_27, %c0_28], %33 {strides = array<i32>} : memref<1x128xf32, #tpu.memory_space<vmem>>, vector<1x128xf32>,
      %c0_29 = arith.constant 0 : index
      %c0_30 = arith.constant 0 : index
      %35 = vector.load %arg5[%c0_29, %c0_30] : memref<1x128xf32, #tpu.memory_space<vmem>>, vector<1x128xf32>
      %36 = arith.mulf %23, %33 : vector<1x128xf32>
      %37 = arith.subf %35, %36 : vector<1x128xf32>
      %c0_31 = arith.constant 0 : index
      %c0_32 = arith.constant 0 : index
      %38 = vector.load %arg8[%c0_31, %c0_32] : memref<1x128xf32, #tpu.memory_space<vmem>>, vector<1x128xf32>
      tpu.vector_store %arg8[%c0_31, %c0_32], %37 {strides = array<i32>} : memref<1x128xf32, #tpu.memory_space<vmem>>, vector<1x128xf32>,
    } else {
    }
    return
  }
  func.func @transform_0(%arg0: i32, %arg1: i32) -> (i32, i32) {
    %c0_i32 = arith.constant 0 : i32
    %c0_i32_0 = arith.constant 0 : i32
    return %arg1, %c0_i32 : i32, i32
  }
  func.func @transform_1(%arg0: i32, %arg1: i32) -> (i32, i32) {
    %c0_i32 = arith.constant 0 : i32
    %c0_i32_0 = arith.constant 0 : i32
    return %c0_i32, %arg0 : i32, i32
  }
  func.func @transform_2(%arg0: i32, %arg1: i32) -> (i32, i32) {
    %c0_i32 = arith.constant 0 : i32
    %c0_i32_0 = arith.constant 0 : i32
    return %c0_i32, %arg0 : i32, i32
  }
  func.func @transform_3(%arg0: i32, %arg1: i32) -> (i32, i32) {
    %c0_i32 = arith.constant 0 : i32
    %c0_i32_0 = arith.constant 0 : i32
    return %c0_i32, %arg0 : i32, i32
  }
  func.func @transform_4(%arg0: i32, %arg1: i32) -> (i32, i32) {
    %c0_i32 = arith.constant 0 : i32
    return %arg1, %arg0 : i32, i32
  }
  func.func @transform_5(%arg0: i32, %arg1: i32) -> (i32, i32) {
    %c0_i32 = arith.constant 0 : i32
    %c0_i32_0 = arith.constant 0 : i32
    return %c0_i32, %arg0 : i32, i32
  }
  func.func @transform_6(%arg0: i32, %arg1: i32) -> (i32, i32) {
    %c0_i32 = arith.constant 0 : i32
    %c0_i32_0 = arith.constant 0 : i32
    return %c0_i32, %arg0 : i32, i32
  }
}

module attributes {stable_mosaic.version = 11 : i64} {
  func.func @kernel(%arg0: i32, %arg1: i32, %arg2: memref<16x128xf32, #tpu.memory_space<vmem>>, %arg3: memref<1x128xf32, #tpu.memory_space<vmem>>, %arg4: memref<1x128xf32, #tpu.memory_space<vmem>>, %arg5: memref<128x128xbf16, #tpu.memory_space<vmem>>, %arg6: memref<1x128xf32, #tpu.memory_space<vmem>>, %arg7: memref<16x128xf32, #tpu.memory_space<vmem>>) attributes {dimension_semantics = [#tpu.dimension_semantics<parallel>, #tpu.dimension_semantics<parallel>], iteration_bounds = array<i64: 1, 1>, scalar_prefetch = 0 : i64, scratch_operands = 0 : i64, tpu.core_type = #tpu.core_type<tc>, window_params = [{transform_indices = @transform_0, window_bounds = array<i64: 16, 128>}, {pipeline_mode = #tpu.pipeline_mode<synchronous>, transform_indices = @transform_1, window_bounds = array<i64: 1, 128>}, {pipeline_mode = #tpu.pipeline_mode<synchronous>, transform_indices = @transform_2, window_bounds = array<i64: 1, 128>}, {transform_indices = @transform_3, window_bounds = array<i64: 128, 128>}, {transform_indices = @transform_4, window_bounds = array<i64: 1, 128>}, {transform_indices = @transform_5, window_bounds = array<i64: 16, 128>}]} {
    %c0 = arith.constant 0 : index
    %c0_0 = arith.constant 0 : index
    %0 = vector.load %arg2[%c0, %c0_0] : memref<16x128xf32, #tpu.memory_space<vmem>>, vector<16x128xf32>
    %c0_1 = arith.constant 0 : index
    %c0_2 = arith.constant 0 : index
    %1 = vector.load %arg3[%c0_1, %c0_2] : memref<1x128xf32, #tpu.memory_space<vmem>>, vector<1x128xf32>
    %2 = vector.broadcast %1 : vector<1x128xf32> to vector<16x128xf32>
    %3 = arith.mulf %0, %2 : vector<16x128xf32>
    %c0_3 = arith.constant 0 : index
    %c0_4 = arith.constant 0 : index
    %4 = vector.load %arg4[%c0_3, %c0_4] : memref<1x128xf32, #tpu.memory_space<vmem>>, vector<1x128xf32>
    %5 = vector.broadcast %4 : vector<1x128xf32> to vector<16x128xf32>
    %6 = arith.addf %3, %5 : vector<16x128xf32>
    %cst = arith.constant 0.000000e+00 : f32
    %7 = vector.broadcast %cst : f32 to vector<16x128xf32>
    %8 = arith.maximumf %6, %7 : vector<16x128xf32>
    %9 = arith.truncf %8 : vector<16x128xf32> to vector<16x128xbf16>
    %c0_5 = arith.constant 0 : index
    %c0_6 = arith.constant 0 : index
    %10 = vector.load %arg5[%c0_5, %c0_6] : memref<128x128xbf16, #tpu.memory_space<vmem>>, vector<128x128xbf16>
    %cst_7 = arith.constant dense<0.000000e+00> : vector<16x128xf32>
    %11 = tpu.matmul %9, %10, %cst_7 {dimension_numbers = #tpu.dot_dimension_numbers<[1], [0], [0], [1], [0, 0, 1, 1], [], []>} : vector<16x128xbf16>, vector<128x128xbf16>, vector<16x128xf32> -> vector<16x128xf32>
    %c0_8 = arith.constant 0 : index
    %c0_9 = arith.constant 0 : index
    %12 = vector.load %arg6[%c0_8, %c0_9] : memref<1x128xf32, #tpu.memory_space<vmem>>, vector<1x128xf32>
    %13 = vector.broadcast %12 : vector<1x128xf32> to vector<16x128xf32>
    %14 = arith.addf %11, %13 : vector<16x128xf32>
    %c0_10 = arith.constant 0 : index
    %c0_11 = arith.constant 0 : index
    %15 = vector.load %arg7[%c0_10, %c0_11] : memref<16x128xf32, #tpu.memory_space<vmem>>, vector<16x128xf32>
    tpu.vector_store %arg7[%c0_10, %c0_11], %14 {strides = array<i32>} : memref<16x128xf32, #tpu.memory_space<vmem>>, vector<16x128xf32>,
    return
  }
  func.func @transform_0(%arg0: i32, %arg1: i32) -> (i32, i32) {
    %c0_i32 = arith.constant 0 : i32
    %c0_i32_0 = arith.constant 0 : i32
    return %arg1, %c0_i32 : i32, i32
  }
  func.func @transform_1(%arg0: i32, %arg1: i32) -> (i32, i32) {
    %c0_i32 = arith.constant 0 : i32
    %c0_i32_0 = arith.constant 0 : i32
    %c0_i32_1 = arith.constant 0 : i32
    return %c0_i32, %c0_i32_0 : i32, i32
  }
  func.func @transform_2(%arg0: i32, %arg1: i32) -> (i32, i32) {
    %c0_i32 = arith.constant 0 : i32
    %c0_i32_0 = arith.constant 0 : i32
    %c0_i32_1 = arith.constant 0 : i32
    return %c0_i32, %c0_i32_0 : i32, i32
  }
  func.func @transform_3(%arg0: i32, %arg1: i32) -> (i32, i32) {
    %c0_i32 = arith.constant 0 : i32
    %c0_i32_0 = arith.constant 0 : i32
    return %c0_i32, %arg0 : i32, i32
  }
  func.func @transform_4(%arg0: i32, %arg1: i32) -> (i32, i32) {
    %c0_i32 = arith.constant 0 : i32
    %c0_i32_0 = arith.constant 0 : i32
    return %c0_i32, %arg0 : i32, i32
  }
  func.func @transform_5(%arg0: i32, %arg1: i32) -> (i32, i32) {
    %c0_i32 = arith.constant 0 : i32
    return %arg1, %arg0 : i32, i32
  }
}

</mosaic_0001>

<llo_original>
// kernel: mlp_forward.4
$region0: #{mlp_forward.4}
  #allocation0 [shape = 'u32[]', space=smem, size = 0x4, offset = 0x4, fixed_abs, tag = 'smem constant byte address 0x4 - core index']
  #allocation1 [shape = 'u32[144,128]{1,0:T(1,128)}', space=vmem, size = 0x12000, scoped, tag = 'internal scratch']
  #allocation2 [shape = 'f32[1,128]{1,0:T(1,128)}', space=vmem, size = 0x200, scoped, tag = 'scratch operand']
  #allocation3 [shape = 'f32[1,128]{1,0:T(1,128)}', space=vmem, size = 0x200, scoped, tag = 'scratch operand']
  %s0 = inlined_call_operand.hbm [shape: f32[16,128], index: 0, kind: input, shape index: {}]
  %s1 = inlined_call_operand.hbm [shape: f32[1,128], index: 1, kind: input, shape index: {}]
  %s2 = inlined_call_operand.hbm [shape: f32[1,128], index: 2, kind: input, shape index: {}]
  %s3 = inlined_call_operand.hbm [shape: bf16[128,128], index: 3, kind: input, shape index: {}]
  %s4 = inlined_call_operand.hbm [shape: f32[1,128], index: 4, kind: input, shape index: {}]
  %s5 = inlined_call_operand.hbm [shape: f32[1,128], index: 5, kind: input, shape index: {}]
  %s6 = inlined_call_operand.hbm [shape: f32[16,128], index: 6, kind: output, shape index: {0}]
  %s7 = inlined_call_operand.hbm [shape: f32[1,128], index: 7, kind: output, shape index: {1}]
  %s8 = inlined_call_operand.hbm [shape: f32[1,128], index: 8, kind: output, shape index: {2}]
  %9 = xla_tuple %s6, %s7, %s8
  %s10 = sld [smem:[#allocation0]]
  $region82: #{mlp_forward.4} parent=0
    _
  %s12 = ssub.s32 1, %s10
  %s13 = scalar_select 0, %s12, %s10
  $region1: #{mlp_forward.4} parent=0
    #allocation4 [shape = 'u8[8192]{0}', space=vmem, size = 0x2000, scoped, tag = 'input window, operand 0, single buffered']
    #allocation5 [shape = 's32[1]{0}', space=sflag, size = 0x4, scoped, tag = 'scoped memory for mlp_forward.4']
    #allocation6 [shape = 's32[1]{0}', space=sflag, size = 0x4, scoped, tag = 'scoped memory for mlp_forward.4']
    #allocation7 [shape = 'u8[512]{0}', space=vmem, size = 0x400, scoped, tag = 'input window, operand 1, single buffered']
    #allocation8 [shape = 's32[1]{0}', space=sflag, size = 0x4, scoped, tag = 'scoped memory for mlp_forward.4']
    #allocation9 [shape = 'u8[512]{0}', space=vmem, size = 0x400, scoped, tag = 'input window, operand 2, single buffered']
    #allocation10 [shape = 'u8[32768]{0}', space=vmem, size = 0x8000, scoped, tag = 'input window, operand 3, single buffered']
    #allocation11 [shape = 's32[1]{0}', space=sflag, size = 0x4, scoped, tag = 'scoped memory for mlp_forward.4']
    #allocation12 [shape = 'u8[512]{0}', space=vmem, size = 0x400, scoped, tag = 'input window, operand 4, single buffered']
    #allocation13 [shape = 'u8[512]{0}', space=vmem, size = 0x400, scoped, tag = 'input window, operand 5, single buffered']
    #allocation14 [shape = 's32[1]{0}', space=sflag, size = 0x4, scoped, tag = 'scoped memory for mlp_forward.4']
    #allocation15 [shape = 'u8[8192]{0}', space=vmem, size = 0x2000, scoped, tag = 'output window, operand 0, single buffered']
    #allocation16 [shape = 'u8[512]{0}', space=vmem, size = 0x400, scoped, tag = 'output window, operand 1, single buffered']
    #allocation17 [shape = 's32[1]{0}', space=sflag, size = 0x4, scoped, tag = 'scoped memory for mlp_forward.4']
    #allocation18 [shape = 'u8[512]{0}', space=vmem, size = 0x400, scoped, tag = 'output window, operand 2, single buffered']
    %14 = vsyncpa [#allocation5], 0
    %15 = vsyncpa [#allocation8], 0
    %16 = vsyncpa [#allocation11], 0
    %17 = vsyncpa [#allocation14], 0
    %18 = vsyncpa [#allocation6], 0
    %19 = vsyncpa [#allocation17], 0
    // Predicated region
    $region2: #{mlp_forward.4} parent=1 // pred_check
      _
    $region3: #{mlp_forward.4} parent=1 // pred_check_branch
      %21 = sbr.rel (0) target = $region5
    $region4: #{mlp_forward.4} parent=1 // pred_region
      %s23 = ssub.s32 256, 256
      %24 = vsyncadd [#allocation5], %s23
      %s25 = sshll.u32 [#allocation4], 4
      %s26 = int_to_ptr.vmem [resolvable:$true] %s25
      %31 = dma.hbm_to_vmem [thread:$0]  %s0, 256, %s26, [#allocation5], 128, 128, 8
    $region5: #{mlp_forward.4} parent=1 // pred_fallthru
      _
    // Predicated region
    $region6: #{mlp_forward.4} parent=1 // pred_check
      _
    $region7: #{mlp_forward.4} parent=1 // pred_check_branch
      %33 = sbr.rel (0) target = $region9
    $region8: #{mlp_forward.4} parent=1 // pred_region
      %s35 = ssub.s32 16, 16
      %36 = vsyncadd [#allocation8], %s35
      %s38 = sshll.u32 [#allocation7], 4
      %s39 = int_to_ptr.vmem [resolvable:$true] %s38
      %41 = dma.hbm_to_vmem [thread:$0]  %s1, 16, %s39, [#allocation8]
    $region9: #{mlp_forward.4} parent=1 // pred_fallthru
      _
    // Predicated region
    $region10: #{mlp_forward.4} parent=1 // pred_check
      _
    $region11: #{mlp_forward.4} parent=1 // pred_check_branch
      %43 = sbr.rel (0) target = $region13
    $region12: #{mlp_forward.4} parent=1 // pred_region
      %s45 = ssub.s32 16, 16
      %46 = vsyncadd [#allocation8], %s45
      %s48 = sshll.u32 [#allocation9], 4
      %s49 = int_to_ptr.vmem [resolvable:$true] %s48
      %51 = dma.hbm_to_vmem [thread:$0]  %s2, 16, %s49, [#allocation8]
    $region13: #{mlp_forward.4} parent=1 // pred_fallthru
      _
    // Predicated region
    $region14: #{mlp_forward.4} parent=1 // pred_check
      _
    $region15: #{mlp_forward.4} parent=1 // pred_check_branch
      %53 = sbr.rel (0) target = $region17
    $region16: #{mlp_forward.4} parent=1 // pred_region
      %s55 = ssub.s32 1024, 1024
      %56 = vsyncadd [#allocation11], %s55
      %s57 = sshll.u32 [#allocation10], 4
      %s58 = int_to_ptr.vmem [resolvable:$true] %s57
      %63 = dma.hbm_to_vmem [thread:$0]  %s3, 1024, %s58, [#allocation11], 64, 64, 4
    $region17: #{mlp_forward.4} parent=1 // pred_fallthru
      _
    // Predicated region
    $region18: #{mlp_forward.4} parent=1 // pred_check
      _
    $region19: #{mlp_forward.4} parent=1 // pred_check_branch
      %65 = sbr.rel (0) target = $region21
    $region20: #{mlp_forward.4} parent=1 // pred_region
      %s67 = ssub.s32 16, 16
      %68 = vsyncadd [#allocation11], %s67
      %s70 = sshll.u32 [#allocation12], 4
      %s71 = int_to_ptr.vmem [resolvable:$true] %s70
      %73 = dma.hbm_to_vmem [thread:$0]  %s4, 16, %s71, [#allocation11]
    $region21: #{mlp_forward.4} parent=1 // pred_fallthru
      _
    // Predicated region
    $region22: #{mlp_forward.4} parent=1 // pred_check
      _
    $region23: #{mlp_forward.4} parent=1 // pred_check_branch
      %75 = sbr.rel (0) target = $region25
    $region24: #{mlp_forward.4} parent=1 // pred_region
      %s77 = ssub.s32 16, 16
      %78 = vsyncadd [#allocation14], %s77
      %s80 = sshll.u32 [#allocation13], 4
      %s81 = int_to_ptr.vmem [resolvable:$true] %s80
      %83 = dma.hbm_to_vmem [thread:$0]  %s5, 16, %s81, [#allocation14]
    $region25: #{mlp_forward.4} parent=1 // pred_fallthru
      _
    // Predicated region
    $region26: #{mlp_forward.4} parent=1 // pred_check
      _
    $region27: #{mlp_forward.4} parent=1 // pred_check_branch
      %85 = sbr.rel (0) target = $region29
    $region28: #{mlp_forward.4} parent=1 // pred_region
      %86 = dma.done [#allocation5], 256
    $region29: #{mlp_forward.4} parent=1 // pred_fallthru
      _
    // Predicated region
    $region30: #{mlp_forward.4} parent=1 // pred_check
      _
    $region31: #{mlp_forward.4} parent=1 // pred_check_branch
      %88 = sbr.rel (0) target = $region33
    $region32: #{mlp_forward.4} parent=1 // pred_region
      %89 = dma.done [#allocation8], 16
    $region33: #{mlp_forward.4} parent=1 // pred_fallthru
      _
    // Predicated region
    $region34: #{mlp_forward.4} parent=1 // pred_check
      _
    $region35: #{mlp_forward.4} parent=1 // pred_check_branch
      %91 = sbr.rel (0) target = $region37
    $region36: #{mlp_forward.4} parent=1 // pred_region
      %92 = dma.done [#allocation8], 16
    $region37: #{mlp_forward.4} parent=1 // pred_fallthru
      _
    // Predicated region
    $region38: #{mlp_forward.4} parent=1 // pred_check
      _
    $region39: #{mlp_forward.4} parent=1 // pred_check_branch
      %94 = sbr.rel (0) target = $region41
    $region40: #{mlp_forward.4} parent=1 // pred_region
      %95 = dma.done [#allocation11], 1024
    $region41: #{mlp_forward.4} parent=1 // pred_fallthru
      _
    // Predicated region
    $region42: #{mlp_forward.4} parent=1 // pred_check
      _
    $region43: #{mlp_forward.4} parent=1 // pred_check_branch
      %97 = sbr.rel (0) target = $region45
    $region44: #{mlp_forward.4} parent=1 // pred_region
      %98 = dma.done [#allocation11], 16
    $region45: #{mlp_forward.4} parent=1 // pred_fallthru
      _
    // Predicated region
    $region46: #{mlp_forward.4} parent=1 // pred_check
      _
    $region47: #{mlp_forward.4} parent=1 // pred_check_branch
      %100 = sbr.rel (0) target = $region49
    $region48: #{mlp_forward.4} parent=1 // pred_region
      %101 = dma.done [#allocation14], 16
    $region49: #{mlp_forward.4} parent=1 // pred_fallthru
      _
    %p103 = scmp.eq.s32.totalorder 0, 0
    // Predicated region
    $region50: #{mlp_forward.4} parent=1 // pred_check
      %p104 = pneg %p103
    $region51: #{mlp_forward.4} parent=1 // pred_check_branch
      %106 = sbr.rel (%p104) target = $region53
    $region52: #{mlp_forward.4} parent=1 // pred_region
      %107 = vst [vmem:[#allocation2] sm:$0x1] 0.0
      %108 = vst [vmem:[#allocation3] sm:$0x1] 0.0
    $region53: #{mlp_forward.4} parent=1 // pred_fallthru
      _
    %v109 = vld [vmem:[#allocation4] sm:$0xff]
    %v110 = vld [vmem:[#allocation4 + $0x8] sm:$0xff]
    %v111 = vld [vmem:[#allocation7] sm:$0x1]
    %v113 = vlaneseq
    %v114 = vshrl.u32 %v113, 7
    %v115 = vsub.s32 0, %v114
    %v116 = vrot.slane %v111, %v115
    %v118 = vmul.f32 %v109, %v116
    %v119 = vmul.f32 %v110, %v116
    %v120 = vld [vmem:[#allocation9] sm:$0x1]
    %v122 = vlaneseq
    %v123 = vshrl.u32 %v122, 7
    %v124 = vsub.s32 0, %v123
    %v125 = vrot.slane %v120, %v124
    %v127 = vadd.f32 %v118, %v125
    %v128 = vadd.f32 %v119, %v125
    %v129 = vmax.f32 %v127, 0.0
    %v130 = vmax.f32 %v128, 0.0
    %v131 = vlaneseq
    %v132 = vshrl.u32 %v131, 7
    %v133 = vadd.s32 %v132, 8
    %s134 = smul.u32 0, 16
    %v135 = vstv %s134
    %v136 = vadd.s32 %v132, %v135
    %v137 = vadd.s32 %v133, %v135
    %vm138 = vcmp.lt.s32.totalorder %v136, 8
    %vm139 = vcmp.lt.s32.totalorder %v137, 8
    %v140 = vsel %vm138, 1, 0
    %v141 = vsel %vm139, 1, 0
    %vm142 = vcmp.eq.s32.totalorder %v140, 1
    %vm143 = vcmp.eq.s32.totalorder %v141, 1
    %v144 = vsel %vm142, %v129, 0.0
    %v145 = vsel %vm143, %v130, 0.0
    %v146 = vpack.c.bf16 %v145, %v144
    %v147 = vld [vmem:[#allocation10] sm:$0xf]
    %v148 = vld [vmem:[#allocation10 + $0x4] sm:$0xf]
    %v149 = vld [vmem:[#allocation10 + $0x8] sm:$0xf]
    %v150 = vld [vmem:[#allocation10 + $0xc] sm:$0xf]
    %v151 = vld [vmem:[#allocation10 + $0x10] sm:$0xf]
    %v152 = vld [vmem:[#allocation10 + $0x14] sm:$0xf]
    %v153 = vld [vmem:[#allocation10 + $0x18] sm:$0xf]
    %v154 = vld [vmem:[#allocation10 + $0x1c] sm:$0xf]
    %v155 = vld [vmem:[#allocation10 + $0x20] sm:$0xf]
    %v156 = vld [vmem:[#allocation10 + $0x24] sm:$0xf]
    %v157 = vld [vmem:[#allocation10 + $0x28] sm:$0xf]
    %v158 = vld [vmem:[#allocation10 + $0x2c] sm:$0xf]
    %v159 = vld [vmem:[#allocation10 + $0x30] sm:$0xf]
    %v160 = vld [vmem:[#allocation10 + $0x34] sm:$0xf]
    %v161 = vld [vmem:[#allocation10 + $0x38] sm:$0xf]
    %v162 = vld [vmem:[#allocation10 + $0x3c] sm:$0xf]
    %v179 = vunpack.c.l.b16 %v147
    %v180 = vunpack.c.l.b16 %v148
    %v181 = vunpack.c.l.b16 %v149
    %v182 = vunpack.c.l.b16 %v150
    %v183 = vunpack.c.l.b16 %v151
    %v184 = vunpack.c.l.b16 %v152
    %v185 = vunpack.c.l.b16 %v153
    %v186 = vunpack.c.l.b16 %v154
    %v187 = vunpack.c.l.b16 %v155
    %v188 = vunpack.c.l.b16 %v156
    %v189 = vunpack.c.l.b16 %v157
    %v190 = vunpack.c.l.b16 %v158
    %v191 = vunpack.c.l.b16 %v159
    %v192 = vunpack.c.l.b16 %v160
    %v193 = vunpack.c.l.b16 %v161
    %v194 = vunpack.c.l.b16 %v162
    %v195 = vpack.c.b16 %v180, %v179
    %v196 = vpack.c.b16 %v182, %v181
    %v197 = vpack.c.b16 %v184, %v183
    %v198 = vpack.c.b16 %v186, %v185
    %v199 = vpack.c.b16 %v188, %v187
    %v200 = vpack.c.b16 %v190, %v189
    %v201 = vpack.c.b16 %v192, %v191
    %v202 = vpack.c.b16 %v194, %v193
    %211 = vmatprep.subr.bf16.mxu0 0
    %212 = vmatpush1.bf16.msra.mxu0 %v195
    %213 = vmatprep.subr.bf16.mxu0 0
    %214 = vmatpush1.bf16.msra.mxu0 %v196
    %215 = vmatprep.subr.bf16.mxu0 0
    %216 = vmatpush1.bf16.msra.mxu0 %v197
    %217 = vmatprep.subr.bf16.mxu0 0
    %218 = vmatpush1.bf16.msra.mxu0 %v198
    %219 = vmatprep.subr.bf16.mxu0 0
    %220 = vmatpush1.bf16.msra.mxu0 %v199
    %221 = vmatprep.subr.bf16.mxu0 0
    %222 = vmatpush1.bf16.msra.mxu0 %v200
    %223 = vmatprep.subr.bf16.mxu0 0
    %224 = vmatpush1.bf16.msra.mxu0 %v201
    %225 = vmatprep.subr.bf16.mxu0 0
    %226 = vmatpush1.bf16.msra.mxu0 %v202
    %227 = vmatprep.subr.bf16.mxu0 0
    %228 = vmatpush1.bf16.msra.mxu0 0
    %229 = vmatprep.subr.bf16.mxu0 0
    %230 = vmatpush1.bf16.msra.mxu0 0
    %231 = vmatprep.subr.bf16.mxu0 0
    %232 = vmatpush1.bf16.msra.mxu0 0
    %233 = vmatprep.subr.bf16.mxu0 0
    %234 = vmatpush1.bf16.msra.mxu0 0
    %235 = vmatprep.subr.bf16.mxu0 0
    %236 = vmatpush1.bf16.msra.mxu0 0
    %237 = vmatprep.subr.bf16.mxu0 0
    %238 = vmatpush1.bf16.msra.mxu0 0
    %239 = vmatprep.subr.bf16.mxu0 0
    %240 = vmatpush1.bf16.msra.mxu0 0
    %241 = vmatprep.subr.bf16.mxu0 0
    %242 = vmatpush1.bf16.msra.mxu0 0
    %243 = vmatprep.mubr.bf16.mxu0 0
    %244 = vmatmul.mubr.bf16.gmra.mrb[0].mxu0 %v146
    %v245 = vpop.f32.mrb[0].mxu0
    %v246 = vadd.f32 0.0, %v245
    %v247 = vpop.f32.mrb[0].mxu0
    %v248 = vpop.f32.mrb[0].mxu0
    %v249 = vadd.f32 0.0, %v248
    %v250 = vpop.f32.mrb[0].mxu0
    %251 = vdwg.mxu0
    %252 = vst [vmem:[#allocation15] sm:$0xff] %v246
    %253 = vst [vmem:[#allocation15 + $0x8] sm:$0xff] %v249
    %v254 = vld [vmem:[#allocation2] sm:$0x1]
    %v255 = vadd.f32 %v246, %v249
    %v256 = vrot.slane %v255, 4
    %v257 = vadd.f32 %v255, %v256
    %v258 = vrot.slane %v257, 2
    %v259 = vadd.f32 %v257, %v258
    %v260 = vrot.slane %v259, 1
    %v261 = vadd.f32 %v259, %v260
    %v262 = vadd.f32 %v254, %v261
    %263 = vst [vmem:[#allocation2] sm:$0x1] %v262
    %v264 = vld [vmem:[#allocation3] sm:$0x1]
    %v265 = vmul.f32 %v246, %v246
    %v266 = vmul.f32 %v249, %v249
    %v267 = vadd.f32 %v265, %v266
    %v268 = vrot.slane %v267, 4
    %v269 = vadd.f32 %v267, %v268
    %v270 = vrot.slane %v269, 2
    %v271 = vadd.f32 %v269, %v270
    %v272 = vrot.slane %v271, 1
    %v273 = vadd.f32 %v271, %v272
    %v274 = vadd.f32 %v264, %v273
    %275 = vst [vmem:[#allocation3] sm:$0x1] %v274
    // Predicated region
    $region54: #{mlp_forward.4} parent=1 // pred_check
      %p276 = pneg %p103
    $region55: #{mlp_forward.4} parent=1 // pred_check_branch
      %278 = sbr.rel (%p276) target = $region57
    $region56: #{mlp_forward.4} parent=1 // pred_region
      %v279 = vld [vmem:[#allocation2] sm:$0x1]
      %v280 = vmul.f32 %v279, 0.125
      %v281 = vld [vmem:[#allocation3] sm:$0x1]
      %v282 = vmul.f32 %v281, 0.125
      %v283 = vmul.f32 %v280, %v280
      %v284 = vsub.f32 %v282, %v283
      %v285 = vld [vmem:[#allocation12] sm:$0x1]
      %v286 = vadd.f32 %v284, 1e-05
      %v287 = vrsqrt.pop %v286
      %v288 = vmul.f32 %v285, %v287
      %289 = vst [vmem:[#allocation16] sm:$0x1] %v288
      %v290 = vld [vmem:[#allocation13] sm:$0x1]
      %v291 = vmul.f32 %v280, %v288
      %v292 = vsub.f32 %v290, %v291
      %293 = vst [vmem:[#allocation18] sm:$0x1] %v292
    $region57: #{mlp_forward.4} parent=1 // pred_fallthru
      _
    // Predicated region
    $region58: #{mlp_forward.4} parent=1 // pred_check
      _
    $region59: #{mlp_forward.4} parent=1 // pred_check_branch
      %295 = sbr.rel (0) target = $region61
    $region60: #{mlp_forward.4} parent=1 // pred_region
      %s297 = ssub.s32 256, 256
      %298 = vsyncadd [#allocation6], %s297
      %s299 = sshll.u32 [#allocation15], 4
      %s300 = int_to_ptr.vmem [resolvable:$true] %s299
      %305 = dma.vmem_to_hbm [thread:$0]  %s300, 256, %s6, [#allocation6], 128, 128, 8
    $region61: #{mlp_forward.4} parent=1 // pred_fallthru
      _
    // Predicated region
    $region62: #{mlp_forward.4} parent=1 // pred_check
      _
    $region63: #{mlp_forward.4} parent=1 // pred_check_branch
      %307 = sbr.rel (0) target = $region65
    $region64: #{mlp_forward.4} parent=1 // pred_region
      %s309 = ssub.s32 16, 16
      %310 = vsyncadd [#allocation17], %s309
      %s312 = sshll.u32 [#allocation16], 4
      %s313 = int_to_ptr.vmem [resolvable:$true] %s312
      %315 = dma.vmem_to_hbm [thread:$0]  %s313, 16, %s7, [#allocation17]
    $region65: #{mlp_forward.4} parent=1 // pred_fallthru
      _
    // Predicated region
    $region66: #{mlp_forward.4} parent=1 // pred_check
      _
    $region67: #{mlp_forward.4} parent=1 // pred_check_branch
      %317 = sbr.rel (0) target = $region69
    $region68: #{mlp_forward.4} parent=1 // pred_region
      %s319 = ssub.s32 16, 16
      %320 = vsyncadd [#allocation17], %s319
      %s322 = sshll.u32 [#allocation18], 4
      %s323 = int_to_ptr.vmem [resolvable:$true] %s322
      %325 = dma.vmem_to_hbm [thread:$0]  %s323, 16, %s8, [#allocation17]
    $region69: #{mlp_forward.4} parent=1 // pred_fallthru
      _
    // Predicated region
    $region70: #{mlp_forward.4} parent=1 // pred_check
      _
    $region71: #{mlp_forward.4} parent=1 // pred_check_branch
      %327 = sbr.rel (0) target = $region73
    $region72: #{mlp_forward.4} parent=1 // pred_region
      %328 = dma.done [#allocation6], 256
    $region73: #{mlp_forward.4} parent=1 // pred_fallthru
      _
    // Predicated region
    $region74: #{mlp_forward.4} parent=1 // pred_check
      _
    $region75: #{mlp_forward.4} parent=1 // pred_check_branch
      %330 = sbr.rel (0) target = $region77
    $region76: #{mlp_forward.4} parent=1 // pred_region
      %331 = dma.done [#allocation17], 16
    $region77: #{mlp_forward.4} parent=1 // pred_fallthru
      _
    // Predicated region
    $region78: #{mlp_forward.4} parent=1 // pred_check
      _
    $region79: #{mlp_forward.4} parent=1 // pred_check_branch
      %333 = sbr.rel (0) target = $region81
    $region80: #{mlp_forward.4} parent=1 // pred_region
      %334 = dma.done [#allocation17], 16
    $region81: #{mlp_forward.4} parent=1 // pred_fallthru
      _
    %335 = vsyncpa [#allocation5], 1
    %336 = vsyncpa [#allocation8], 1
    %337 = vsyncpa [#allocation11], 1
    %338 = vsyncpa [#allocation14], 1
    %339 = vsyncpa [#allocation6], 1
    %340 = vsyncpa [#allocation17], 1

// kernel: mlp_forward.3
$region0: #{mlp_forward.3}
  #allocation0 [shape = 'u32[]', space=smem, size = 0x4, offset = 0x4, fixed_abs, tag = 'smem constant byte address 0x4 - core index']
  #allocation1 [shape = 'u32[144,128]{1,0:T(1,128)}', space=vmem, size = 0x12000, scoped, tag = 'internal scratch']
  #allocation2 [shape = 'f32[1,128]{1,0:T(1,128)}', space=vmem, size = 0x200, scoped, tag = 'scratch operand']
  #allocation3 [shape = 'f32[1,128]{1,0:T(1,128)}', space=vmem, size = 0x200, scoped, tag = 'scratch operand']
  %s0 = inlined_call_operand.hbm [shape: bf16[16,128], index: 0, kind: input, shape index: {}]
  %s1 = inlined_call_operand.hbm [shape: bf16[128,128], index: 1, kind: input, shape index: {}]
  %s2 = inlined_call_operand.hbm [shape: f32[1,128], index: 2, kind: input, shape index: {}]
  %s3 = inlined_call_operand.hbm [shape: f32[1,128], index: 3, kind: input, shape index: {}]
  %s4 = inlined_call_operand.hbm [shape: f32[16,128], index: 4, kind: output, shape index: {0}]
  %s5 = inlined_call_operand.hbm [shape: f32[1,128], index: 5, kind: output, shape index: {1}]
  %s6 = inlined_call_operand.hbm [shape: f32[1,128], index: 6, kind: output, shape index: {2}]
  %7 = xla_tuple %s4, %s5, %s6
  %s8 = sld [smem:[#allocation0]]
  $region66: #{mlp_forward.3} parent=0
    _
  %s10 = ssub.s32 1, %s8
  %s11 = scalar_select 0, %s10, %s8
  $region1: #{mlp_forward.3} parent=0
    #allocation4 [shape = 'u8[4096]{0}', space=vmem, size = 0x1000, scoped, tag = 'input window, operand 0, single buffered']
    #allocation5 [shape = 's32[1]{0}', space=sflag, size = 0x4, scoped, tag = 'scoped memory for mlp_forward.3']
    #allocation6 [shape = 's32[1]{0}', space=sflag, size = 0x4, scoped, tag = 'scoped memory for mlp_forward.3']
    #allocation7 [shape = 'u8[32768]{0}', space=vmem, size = 0x8000, scoped, tag = 'input window, operand 1, single buffered']
    #allocation8 [shape = 's32[1]{0}', space=sflag, size = 0x4, scoped, tag = 'scoped memory for mlp_forward.3']
    #allocation9 [shape = 'u8[512]{0}', space=vmem, size = 0x400, scoped, tag = 'input window, operand 2, single buffered']
    #allocation10 [shape = 'u8[512]{0}', space=vmem, size = 0x400, scoped, tag = 'input window, operand 3, single buffered']
    #allocation11 [shape = 's32[1]{0}', space=sflag, size = 0x4, scoped, tag = 'scoped memory for mlp_forward.3']
    #allocation12 [shape = 'u8[8192]{0}', space=vmem, size = 0x2000, scoped, tag = 'output window, operand 0, single buffered']
    #allocation13 [shape = 'u8[512]{0}', space=vmem, size = 0x400, scoped, tag = 'output window, operand 1, single buffered']
    #allocation14 [shape = 's32[1]{0}', space=sflag, size = 0x4, scoped, tag = 'scoped memory for mlp_forward.3']
    #allocation15 [shape = 'u8[512]{0}', space=vmem, size = 0x400, scoped, tag = 'output window, operand 2, single buffered']
    %12 = vsyncpa [#allocation5], 0
    %13 = vsyncpa [#allocation8], 0
    %14 = vsyncpa [#allocation11], 0
    %15 = vsyncpa [#allocation6], 0
    %16 = vsyncpa [#allocation14], 0
    // Predicated region
    $region2: #{mlp_forward.3} parent=1 // pred_check
      _
    $region3: #{mlp_forward.3} parent=1 // pred_check_branch
      %18 = sbr.rel (0) target = $region5
    $region4: #{mlp_forward.3} parent=1 // pred_region
      %s20 = ssub.s32 128, 128
      %21 = vsyncadd [#allocation5], %s20
      %s22 = sshll.u32 [#allocation4], 4
      %s23 = int_to_ptr.vmem [resolvable:$true] %s22
      %28 = dma.hbm_to_vmem [thread:$0]  %s0, 128, %s23, [#allocation5], 64, 64, 4
    $region5: #{mlp_forward.3} parent=1 // pred_fallthru
      _
    // Predicated region
    $region6: #{mlp_forward.3} parent=1 // pred_check
      _
    $region7: #{mlp_forward.3} parent=1 // pred_check_branch
      %30 = sbr.rel (0) target = $region9
    $region8: #{mlp_forward.3} parent=1 // pred_region
      %s32 = ssub.s32 1024, 1024
      %33 = vsyncadd [#allocation8], %s32
      %s34 = sshll.u32 [#allocation7], 4
      %s35 = int_to_ptr.vmem [resolvable:$true] %s34
      %40 = dma.hbm_to_vmem [thread:$0]  %s1, 1024, %s35, [#allocation8], 64, 64, 4
    $region9: #{mlp_forward.3} parent=1 // pred_fallthru
      _
    // Predicated region
    $region10: #{mlp_forward.3} parent=1 // pred_check
      _
    $region11: #{mlp_forward.3} parent=1 // pred_check_branch
      %42 = sbr.rel (0) target = $region13
    $region12: #{mlp_forward.3} parent=1 // pred_region
      %s44 = ssub.s32 16, 16
      %45 = vsyncadd [#allocation8], %s44
      %s47 = sshll.u32 [#allocation9], 4
      %s48 = int_to_ptr.vmem [resolvable:$true] %s47
      %50 = dma.hbm_to_vmem [thread:$0]  %s2, 16, %s48, [#allocation8]
    $region13: #{mlp_forward.3} parent=1 // pred_fallthru
      _
    // Predicated region
    $region14: #{mlp_forward.3} parent=1 // pred_check
      _
    $region15: #{mlp_forward.3} parent=1 // pred_check_branch
      %52 = sbr.rel (0) target = $region17
    $region16: #{mlp_forward.3} parent=1 // pred_region
      %s54 = ssub.s32 16, 16
      %55 = vsyncadd [#allocation11], %s54
      %s57 = sshll.u32 [#allocation10], 4
      %s58 = int_to_ptr.vmem [resolvable:$true] %s57
      %60 = dma.hbm_to_vmem [thread:$0]  %s3, 16, %s58, [#allocation11]
    $region17: #{mlp_forward.3} parent=1 // pred_fallthru
      _
    // Predicated region
    $region18: #{mlp_forward.3} parent=1 // pred_check
      _
    $region19: #{mlp_forward.3} parent=1 // pred_check_branch
      %62 = sbr.rel (0) target = $region21
    $region20: #{mlp_forward.3} parent=1 // pred_region
      %63 = dma.done [#allocation5], 128
    $region21: #{mlp_forward.3} parent=1 // pred_fallthru
      _
    // Predicated region
    $region22: #{mlp_forward.3} parent=1 // pred_check
      _
    $region23: #{mlp_forward.3} parent=1 // pred_check_branch
      %65 = sbr.rel (0) target = $region25
    $region24: #{mlp_forward.3} parent=1 // pred_region
      %66 = dma.done [#allocation8], 1024
    $region25: #{mlp_forward.3} parent=1 // pred_fallthru
      _
    // Predicated region
    $region26: #{mlp_forward.3} parent=1 // pred_check
      _
    $region27: #{mlp_forward.3} parent=1 // pred_check_branch
      %68 = sbr.rel (0) target = $region29
    $region28: #{mlp_forward.3} parent=1 // pred_region
      %69 = dma.done [#allocation8], 16
    $region29: #{mlp_forward.3} parent=1 // pred_fallthru
      _
    // Predicated region
    $region30: #{mlp_forward.3} parent=1 // pred_check
      _
    $region31: #{mlp_forward.3} parent=1 // pred_check_branch
      %71 = sbr.rel (0) target = $region33
    $region32: #{mlp_forward.3} parent=1 // pred_region
      %72 = dma.done [#allocation11], 16
    $region33: #{mlp_forward.3} parent=1 // pred_fallthru
      _
    %p74 = scmp.eq.s32.totalorder 0, 0
    // Predicated region
    $region34: #{mlp_forward.3} parent=1 // pred_check
      %p75 = pneg %p74
    $region35: #{mlp_forward.3} parent=1 // pred_check_branch
      %77 = sbr.rel (%p75) target = $region37
    $region36: #{mlp_forward.3} parent=1 // pred_region
      %78 = vst [vmem:[#allocation2] sm:$0x1] 0.0
      %79 = vst [vmem:[#allocation3] sm:$0x1] 0.0
    $region37: #{mlp_forward.3} parent=1 // pred_fallthru
      _
    %v80 = vld [vmem:[#allocation4] sm:$0xf]
    %v81 = vld [vmem:[#allocation4 + $0x4] sm:$0xf]
    %v82 = vld [vmem:[#allocation7] sm:$0xf]
    %v83 = vld [vmem:[#allocation7 + $0x4] sm:$0xf]
    %v84 = vld [vmem:[#allocation7 + $0x8] sm:$0xf]
    %v85 = vld [vmem:[#allocation7 + $0xc] sm:$0xf]
    %v86 = vld [vmem:[#allocation7 + $0x10] sm:$0xf]
    %v87 = vld [vmem:[#allocation7 + $0x14] sm:$0xf]
    %v88 = vld [vmem:[#allocation7 + $0x18] sm:$0xf]
    %v89 = vld [vmem:[#allocation7 + $0x1c] sm:$0xf]
    %v90 = vld [vmem:[#allocation7 + $0x20] sm:$0xf]
    %v91 = vld [vmem:[#allocation7 + $0x24] sm:$0xf]
    %v92 = vld [vmem:[#allocation7 + $0x28] sm:$0xf]
    %v93 = vld [vmem:[#allocation7 + $0x2c] sm:$0xf]
    %v94 = vld [vmem:[#allocation7 + $0x30] sm:$0xf]
    %v95 = vld [vmem:[#allocation7 + $0x34] sm:$0xf]
    %v96 = vld [vmem:[#allocation7 + $0x38] sm:$0xf]
    %v97 = vld [vmem:[#allocation7 + $0x3c] sm:$0xf]
    %v100 = vunpack.c.l.b16 %v80
    %v101 = vunpack.c.l.b16 %v81
    %v102 = vpack.c.b16 %v101, %v100
    %v120 = vunpack.c.l.b16 %v82
    %v121 = vunpack.c.l.b16 %v83
    %v122 = vunpack.c.l.b16 %v84
    %v123 = vunpack.c.l.b16 %v85
    %v124 = vunpack.c.l.b16 %v86
    %v125 = vunpack.c.l.b16 %v87
    %v126 = vunpack.c.l.b16 %v88
    %v127 = vunpack.c.l.b16 %v89
    %v128 = vunpack.c.l.b16 %v90
    %v129 = vunpack.c.l.b16 %v91
    %v130 = vunpack.c.l.b16 %v92
    %v131 = vunpack.c.l.b16 %v93
    %v132 = vunpack.c.l.b16 %v94
    %v133 = vunpack.c.l.b16 %v95
    %v134 = vunpack.c.l.b16 %v96
    %v135 = vunpack.c.l.b16 %v97
    %v136 = vpack.c.b16 %v121, %v120
    %v137 = vpack.c.b16 %v123, %v122
    %v138 = vpack.c.b16 %v125, %v124
    %v139 = vpack.c.b16 %v127, %v126
    %v140 = vpack.c.b16 %v129, %v128
    %v141 = vpack.c.b16 %v131, %v130
    %v142 = vpack.c.b16 %v133, %v132
    %v143 = vpack.c.b16 %v135, %v134
    %152 = vmatprep.subr.bf16.mxu0 0
    %153 = vmatpush1.bf16.msra.mxu0 %v136
    %154 = vmatprep.subr.bf16.mxu0 0
    %155 = vmatpush1.bf16.msra.mxu0 %v137
    %156 = vmatprep.subr.bf16.mxu0 0
    %157 = vmatpush1.bf16.msra.mxu0 %v138
    %158 = vmatprep.subr.bf16.mxu0 0
    %159 = vmatpush1.bf16.msra.mxu0 %v139
    %160 = vmatprep.subr.bf16.mxu0 0
    %161 = vmatpush1.bf16.msra.mxu0 %v140
    %162 = vmatprep.subr.bf16.mxu0 0
    %163 = vmatpush1.bf16.msra.mxu0 %v141
    %164 = vmatprep.subr.bf16.mxu0 0
    %165 = vmatpush1.bf16.msra.mxu0 %v142
    %166 = vmatprep.subr.bf16.mxu0 0
    %167 = vmatpush1.bf16.msra.mxu0 %v143
    %168 = vmatprep.subr.bf16.mxu0 0
    %169 = vmatpush1.bf16.msra.mxu0 0
    %170 = vmatprep.subr.bf16.mxu0 0
    %171 = vmatpush1.bf16.msra.mxu0 0
    %172 = vmatprep.subr.bf16.mxu0 0
    %173 = vmatpush1.bf16.msra.mxu0 0
    %174 = vmatprep.subr.bf16.mxu0 0
    %175 = vmatpush1.bf16.msra.mxu0 0
    %176 = vmatprep.subr.bf16.mxu0 0
    %177 = vmatpush1.bf16.msra.mxu0 0
    %178 = vmatprep.subr.bf16.mxu0 0
    %179 = vmatpush1.bf16.msra.mxu0 0
    %180 = vmatprep.subr.bf16.mxu0 0
    %181 = vmatpush1.bf16.msra.mxu0 0
    %182 = vmatprep.subr.bf16.mxu0 0
    %183 = vmatpush1.bf16.msra.mxu0 0
    %184 = vmatprep.mubr.bf16.mxu0 0
    %185 = vmatmul.mubr.bf16.gmra.mrb[0].mxu0 %v102
    %v186 = vpop.f32.mrb[0].mxu0
    %v187 = vadd.f32 0.0, %v186
    %v188 = vpop.f32.mrb[0].mxu0
    %v189 = vpop.f32.mrb[0].mxu0
    %v190 = vadd.f32 0.0, %v189
    %v191 = vpop.f32.mrb[0].mxu0
    %192 = vdwg.mxu0
    %193 = vst [vmem:[#allocation12] sm:$0xff] %v187
    %194 = vst [vmem:[#allocation12 + $0x8] sm:$0xff] %v190
    %v195 = vld [vmem:[#allocation2] sm:$0x1]
    %v196 = vadd.f32 %v187, %v190
    %v197 = vrot.slane %v196, 4
    %v198 = vadd.f32 %v196, %v197
    %v199 = vrot.slane %v198, 2
    %v200 = vadd.f32 %v198, %v199
    %v201 = vrot.slane %v200, 1
    %v202 = vadd.f32 %v200, %v201
    %v203 = vadd.f32 %v195, %v202
    %204 = vst [vmem:[#allocation2] sm:$0x1] %v203
    %v205 = vld [vmem:[#allocation3] sm:$0x1]
    %v206 = vmul.f32 %v187, %v187
    %v207 = vmul.f32 %v190, %v190
    %v208 = vadd.f32 %v206, %v207
    %v209 = vrot.slane %v208, 4
    %v210 = vadd.f32 %v208, %v209
    %v211 = vrot.slane %v210, 2
    %v212 = vadd.f32 %v210, %v211
    %v213 = vrot.slane %v212, 1
    %v214 = vadd.f32 %v212, %v213
    %v215 = vadd.f32 %v205, %v214
    %216 = vst [vmem:[#allocation3] sm:$0x1] %v215
    // Predicated region
    $region38: #{mlp_forward.3} parent=1 // pred_check
      %p217 = pneg %p74
    $region39: #{mlp_forward.3} parent=1 // pred_check_branch
      %219 = sbr.rel (%p217) target = $region41
    $region40: #{mlp_forward.3} parent=1 // pred_region
      %v220 = vld [vmem:[#allocation2] sm:$0x1]
      %v221 = vmul.f32 %v220, 0.125
      %v222 = vld [vmem:[#allocation3] sm:$0x1]
      %v223 = vmul.f32 %v222, 0.125
      %v224 = vmul.f32 %v221, %v221
      %v225 = vsub.f32 %v223, %v224
      %v226 = vld [vmem:[#allocation9] sm:$0x1]
      %v227 = vadd.f32 %v225, 1e-05
      %v228 = vrsqrt.pop %v227
      %v229 = vmul.f32 %v226, %v228
      %230 = vst [vmem:[#allocation13] sm:$0x1] %v229
      %v231 = vld [vmem:[#allocation10] sm:$0x1]
      %v232 = vmul.f32 %v221, %v229
      %v233 = vsub.f32 %v231, %v232
      %234 = vst [vmem:[#allocation15] sm:$0x1] %v233
    $region41: #{mlp_forward.3} parent=1 // pred_fallthru
      _
    // Predicated region
    $region42: #{mlp_forward.3} parent=1 // pred_check
      _
    $region43: #{mlp_forward.3} parent=1 // pred_check_branch
      %236 = sbr.rel (0) target = $region45
    $region44: #{mlp_forward.3} parent=1 // pred_region
      %s238 = ssub.s32 256, 256
      %239 = vsyncadd [#allocation6], %s238
      %s240 = sshll.u32 [#allocation12], 4
      %s241 = int_to_ptr.vmem [resolvable:$true] %s240
      %246 = dma.vmem_to_hbm [thread:$0]  %s241, 256, %s4, [#allocation6], 128, 128, 8
    $region45: #{mlp_forward.3} parent=1 // pred_fallthru
      _
    // Predicated region
    $region46: #{mlp_forward.3} parent=1 // pred_check
      _
    $region47: #{mlp_forward.3} parent=1 // pred_check_branch
      %248 = sbr.rel (0) target = $region49
    $region48: #{mlp_forward.3} parent=1 // pred_region
      %s250 = ssub.s32 16, 16
      %251 = vsyncadd [#allocation14], %s250
      %s253 = sshll.u32 [#allocation13], 4
      %s254 = int_to_ptr.vmem [resolvable:$true] %s253
      %256 = dma.vmem_to_hbm [thread:$0]  %s254, 16, %s5, [#allocation14]
    $region49: #{mlp_forward.3} parent=1 // pred_fallthru
      _
    // Predicated region
    $region50: #{mlp_forward.3} parent=1 // pred_check
      _
    $region51: #{mlp_forward.3} parent=1 // pred_check_branch
      %258 = sbr.rel (0) target = $region53
    $region52: #{mlp_forward.3} parent=1 // pred_region
      %s260 = ssub.s32 16, 16
      %261 = vsyncadd [#allocation14], %s260
      %s263 = sshll.u32 [#allocation15], 4
      %s264 = int_to_ptr.vmem [resolvable:$true] %s263
      %266 = dma.vmem_to_hbm [thread:$0]  %s264, 16, %s6, [#allocation14]
    $region53: #{mlp_forward.3} parent=1 // pred_fallthru
      _
    // Predicated region
    $region54: #{mlp_forward.3} parent=1 // pred_check
      _
    $region55: #{mlp_forward.3} parent=1 // pred_check_branch
      %268 = sbr.rel (0) target = $region57
    $region56: #{mlp_forward.3} parent=1 // pred_region
      %269 = dma.done [#allocation6], 256
    $region57: #{mlp_forward.3} parent=1 // pred_fallthru
      _
    // Predicated region
    $region58: #{mlp_forward.3} parent=1 // pred_check
      _
    $region59: #{mlp_forward.3} parent=1 // pred_check_branch
      %271 = sbr.rel (0) target = $region61
    $region60: #{mlp_forward.3} parent=1 // pred_region
      %272 = dma.done [#allocation14], 16
    $region61: #{mlp_forward.3} parent=1 // pred_fallthru
      _
    // Predicated region
    $region62: #{mlp_forward.3} parent=1 // pred_check
      _
    $region63: #{mlp_forward.3} parent=1 // pred_check_branch
      %274 = sbr.rel (0) target = $region65
    $region64: #{mlp_forward.3} parent=1 // pred_region
      %275 = dma.done [#allocation14], 16
    $region65: #{mlp_forward.3} parent=1 // pred_fallthru
      _
    %276 = vsyncpa [#allocation5], 1
    %277 = vsyncpa [#allocation8], 1
    %278 = vsyncpa [#allocation11], 1
    %279 = vsyncpa [#allocation6], 1
    %280 = vsyncpa [#allocation14], 1

// kernel: mlp_forward.5
$region0: #{mlp_forward.5}
  #allocation0 [shape = 'u32[]', space=smem, size = 0x4, offset = 0x4, fixed_abs, tag = 'smem constant byte address 0x4 - core index']
  #allocation1 [shape = 'u32[144,128]{1,0:T(1,128)}', space=vmem, size = 0x12000, scoped, tag = 'internal scratch']
  %s0 = inlined_call_operand.hbm [shape: f32[16,128], index: 0, kind: input, shape index: {}]
  %s1 = inlined_call_operand.hbm [shape: f32[1,128], index: 1, kind: input, shape index: {}]
  %s2 = inlined_call_operand.hbm [shape: f32[1,128], index: 2, kind: input, shape index: {}]
  %s3 = inlined_call_operand.hbm [shape: bf16[128,128], index: 3, kind: input, shape index: {}]
  %s4 = inlined_call_operand.hbm [shape: f32[1,128], index: 4, kind: input, shape index: {}]
  %s5 = inlined_call_operand.hbm [shape: f32[16,128], index: 5, kind: output, shape index: {}]
  %s6 = sld [smem:[#allocation0]]
  $region50: #{mlp_forward.5} parent=0
    _
  %s8 = ssub.s32 1, %s6
  %s9 = scalar_select 0, %s8, %s6
  $region1: #{mlp_forward.5} parent=0
    #allocation2 [shape = 'u8[8192]{0}', space=vmem, size = 0x2000, scoped, tag = 'input window, operand 0, single buffered']
    #allocation3 [shape = 's32[1]{0}', space=sflag, size = 0x4, scoped, tag = 'scoped memory for mlp_forward.5']
    #allocation4 [shape = 's32[1]{0}', space=sflag, size = 0x4, scoped, tag = 'scoped memory for mlp_forward.5']
    #allocation5 [shape = 'u8[512]{0}', space=vmem, size = 0x400, scoped, tag = 'input window, operand 1, single buffered']
    #allocation6 [shape = 's32[1]{0}', space=sflag, size = 0x4, scoped, tag = 'scoped memory for mlp_forward.5']
    #allocation7 [shape = 'u8[512]{0}', space=vmem, size = 0x400, scoped, tag = 'input window, operand 2, single buffered']
    #allocation8 [shape = 'u8[32768]{0}', space=vmem, size = 0x8000, scoped, tag = 'input window, operand 3, single buffered']
    #allocation9 [shape = 's32[1]{0}', space=sflag, size = 0x4, scoped, tag = 'scoped memory for mlp_forward.5']
    #allocation10 [shape = 'u8[512]{0}', space=vmem, size = 0x400, scoped, tag = 'input window, operand 4, single buffered']
    #allocation11 [shape = 'u8[8192]{0}', space=vmem, size = 0x2000, scoped, tag = 'output window, operand 0, single buffered']
    %10 = vsyncpa [#allocation3], 0
    %11 = vsyncpa [#allocation6], 0
    %12 = vsyncpa [#allocation9], 0
    %13 = vsyncpa [#allocation4], 0
    // Predicated region
    $region2: #{mlp_forward.5} parent=1 // pred_check
      _
    $region3: #{mlp_forward.5} parent=1 // pred_check_branch
      %15 = sbr.rel (0) target = $region5
    $region4: #{mlp_forward.5} parent=1 // pred_region
      %s17 = ssub.s32 256, 256
      %18 = vsyncadd [#allocation3], %s17
      %s19 = sshll.u32 [#allocation2], 4
      %s20 = int_to_ptr.vmem [resolvable:$true] %s19
      %25 = dma.hbm_to_vmem [thread:$0]  %s0, 256, %s20, [#allocation3], 128, 128, 8
    $region5: #{mlp_forward.5} parent=1 // pred_fallthru
      _
    // Predicated region
    $region6: #{mlp_forward.5} parent=1 // pred_check
      _
    $region7: #{mlp_forward.5} parent=1 // pred_check_branch
      %27 = sbr.rel (0) target = $region9
    $region8: #{mlp_forward.5} parent=1 // pred_region
      %s29 = ssub.s32 16, 16
      %30 = vsyncadd [#allocation6], %s29
      %s32 = sshll.u32 [#allocation5], 4
      %s33 = int_to_ptr.vmem [resolvable:$true] %s32
      %35 = dma.hbm_to_vmem [thread:$0]  %s1, 16, %s33, [#allocation6]
    $region9: #{mlp_forward.5} parent=1 // pred_fallthru
      _
    // Predicated region
    $region10: #{mlp_forward.5} parent=1 // pred_check
      _
    $region11: #{mlp_forward.5} parent=1 // pred_check_branch
      %37 = sbr.rel (0) target = $region13
    $region12: #{mlp_forward.5} parent=1 // pred_region
      %s39 = ssub.s32 16, 16
      %40 = vsyncadd [#allocation6], %s39
      %s42 = sshll.u32 [#allocation7], 4
      %s43 = int_to_ptr.vmem [resolvable:$true] %s42
      %45 = dma.hbm_to_vmem [thread:$0]  %s2, 16, %s43, [#allocation6]
    $region13: #{mlp_forward.5} parent=1 // pred_fallthru
      _
    // Predicated region
    $region14: #{mlp_forward.5} parent=1 // pred_check
      _
    $region15: #{mlp_forward.5} parent=1 // pred_check_branch
      %47 = sbr.rel (0) target = $region17
    $region16: #{mlp_forward.5} parent=1 // pred_region
      %s49 = ssub.s32 1024, 1024
      %50 = vsyncadd [#allocation9], %s49
      %s51 = sshll.u32 [#allocation8], 4
      %s52 = int_to_ptr.vmem [resolvable:$true] %s51
      %57 = dma.hbm_to_vmem [thread:$0]  %s3, 1024, %s52, [#allocation9], 64, 64, 4
    $region17: #{mlp_forward.5} parent=1 // pred_fallthru
      _
    // Predicated region
    $region18: #{mlp_forward.5} parent=1 // pred_check
      _
    $region19: #{mlp_forward.5} parent=1 // pred_check_branch
      %59 = sbr.rel (0) target = $region21
    $region20: #{mlp_forward.5} parent=1 // pred_region
      %s61 = ssub.s32 16, 16
      %62 = vsyncadd [#allocation9], %s61
      %s64 = sshll.u32 [#allocation10], 4
      %s65 = int_to_ptr.vmem [resolvable:$true] %s64
      %67 = dma.hbm_to_vmem [thread:$0]  %s4, 16, %s65, [#allocation9]
    $region21: #{mlp_forward.5} parent=1 // pred_fallthru
      _
    // Predicated region
    $region22: #{mlp_forward.5} parent=1 // pred_check
      _
    $region23: #{mlp_forward.5} parent=1 // pred_check_branch
      %69 = sbr.rel (0) target = $region25
    $region24: #{mlp_forward.5} parent=1 // pred_region
      %70 = dma.done [#allocation3], 256
    $region25: #{mlp_forward.5} parent=1 // pred_fallthru
      _
    // Predicated region
    $region26: #{mlp_forward.5} parent=1 // pred_check
      _
    $region27: #{mlp_forward.5} parent=1 // pred_check_branch
      %72 = sbr.rel (0) target = $region29
    $region28: #{mlp_forward.5} parent=1 // pred_region
      %73 = dma.done [#allocation6], 16
    $region29: #{mlp_forward.5} parent=1 // pred_fallthru
      _
    // Predicated region
    $region30: #{mlp_forward.5} parent=1 // pred_check
      _
    $region31: #{mlp_forward.5} parent=1 // pred_check_branch
      %75 = sbr.rel (0) target = $region33
    $region32: #{mlp_forward.5} parent=1 // pred_region
      %76 = dma.done [#allocation6], 16
    $region33: #{mlp_forward.5} parent=1 // pred_fallthru
      _
    // Predicated region
    $region34: #{mlp_forward.5} parent=1 // pred_check
      _
    $region35: #{mlp_forward.5} parent=1 // pred_check_branch
      %78 = sbr.rel (0) target = $region37
    $region36: #{mlp_forward.5} parent=1 // pred_region
      %79 = dma.done [#allocation9], 1024
    $region37: #{mlp_forward.5} parent=1 // pred_fallthru
      _
    // Predicated region
    $region38: #{mlp_forward.5} parent=1 // pred_check
      _
    $region39: #{mlp_forward.5} parent=1 // pred_check_branch
      %81 = sbr.rel (0) target = $region41
    $region40: #{mlp_forward.5} parent=1 // pred_region
      %82 = dma.done [#allocation9], 16
    $region41: #{mlp_forward.5} parent=1 // pred_fallthru
      _
    %v84 = vld [vmem:[#allocation2] sm:$0xff]
    %v85 = vld [vmem:[#allocation2 + $0x8] sm:$0xff]
    %v86 = vld [vmem:[#allocation5] sm:$0x1]
    %v88 = vlaneseq
    %v89 = vshrl.u32 %v88, 7
    %v90 = vsub.s32 0, %v89
    %v91 = vrot.slane %v86, %v90
    %v93 = vmul.f32 %v84, %v91
    %v94 = vmul.f32 %v85, %v91
    %v95 = vld [vmem:[#allocation7] sm:$0x1]
    %v97 = vlaneseq
    %v98 = vshrl.u32 %v97, 7
    %v99 = vsub.s32 0, %v98
    %v100 = vrot.slane %v95, %v99
    %v102 = vadd.f32 %v93, %v100
    %v103 = vadd.f32 %v94, %v100
    %v104 = vmax.f32 %v102, 0.0
    %v105 = vmax.f32 %v103, 0.0
    %v106 = vpack.c.bf16 %v105, %v104
    %v107 = vld [vmem:[#allocation8] sm:$0xf]
    %v108 = vld [vmem:[#allocation8 + $0x4] sm:$0xf]
    %v109 = vld [vmem:[#allocation8 + $0x8] sm:$0xf]
    %v110 = vld [vmem:[#allocation8 + $0xc] sm:$0xf]
    %v111 = vld [vmem:[#allocation8 + $0x10] sm:$0xf]
    %v112 = vld [vmem:[#allocation8 + $0x14] sm:$0xf]
    %v113 = vld [vmem:[#allocation8 + $0x18] sm:$0xf]
    %v114 = vld [vmem:[#allocation8 + $0x1c] sm:$0xf]
    %v115 = vld [vmem:[#allocation8 + $0x20] sm:$0xf]
    %v116 = vld [vmem:[#allocation8 + $0x24] sm:$0xf]
    %v117 = vld [vmem:[#allocation8 + $0x28] sm:$0xf]
    %v118 = vld [vmem:[#allocation8 + $0x2c] sm:$0xf]
    %v119 = vld [vmem:[#allocation8 + $0x30] sm:$0xf]
    %v120 = vld [vmem:[#allocation8 + $0x34] sm:$0xf]
    %v121 = vld [vmem:[#allocation8 + $0x38] sm:$0xf]
    %v122 = vld [vmem:[#allocation8 + $0x3c] sm:$0xf]
    %v123 = vld [vmem:[#allocation10] sm:$0x1]
    %v125 = vlaneseq
    %v126 = vshrl.u32 %v125, 7
    %v127 = vsub.s32 0, %v126
    %v128 = vrot.slane %v123, %v127
    %v146 = vunpack.c.l.b16 %v107
    %v147 = vunpack.c.l.b16 %v108
    %v148 = vunpack.c.l.b16 %v109
    %v149 = vunpack.c.l.b16 %v110
    %v150 = vunpack.c.l.b16 %v111
    %v151 = vunpack.c.l.b16 %v112
    %v152 = vunpack.c.l.b16 %v113
    %v153 = vunpack.c.l.b16 %v114
    %v154 = vunpack.c.l.b16 %v115
    %v155 = vunpack.c.l.b16 %v116
    %v156 = vunpack.c.l.b16 %v117
    %v157 = vunpack.c.l.b16 %v118
    %v158 = vunpack.c.l.b16 %v119
    %v159 = vunpack.c.l.b16 %v120
    %v160 = vunpack.c.l.b16 %v121
    %v161 = vunpack.c.l.b16 %v122
    %v162 = vpack.c.b16 %v147, %v146
    %v163 = vpack.c.b16 %v149, %v148
    %v164 = vpack.c.b16 %v151, %v150
    %v165 = vpack.c.b16 %v153, %v152
    %v166 = vpack.c.b16 %v155, %v154
    %v167 = vpack.c.b16 %v157, %v156
    %v168 = vpack.c.b16 %v159, %v158
    %v169 = vpack.c.b16 %v161, %v160
    %178 = vmatprep.subr.bf16.mxu0 0
    %179 = vmatpush1.bf16.msra.mxu0 %v162
    %180 = vmatprep.subr.bf16.mxu0 0
    %181 = vmatpush1.bf16.msra.mxu0 %v163
    %182 = vmatprep.subr.bf16.mxu0 0
    %183 = vmatpush1.bf16.msra.mxu0 %v164
    %184 = vmatprep.subr.bf16.mxu0 0
    %185 = vmatpush1.bf16.msra.mxu0 %v165
    %186 = vmatprep.subr.bf16.mxu0 0
    %187 = vmatpush1.bf16.msra.mxu0 %v166
    %188 = vmatprep.subr.bf16.mxu0 0
    %189 = vmatpush1.bf16.msra.mxu0 %v167
    %190 = vmatprep.subr.bf16.mxu0 0
    %191 = vmatpush1.bf16.msra.mxu0 %v168
    %192 = vmatprep.subr.bf16.mxu0 0
    %193 = vmatpush1.bf16.msra.mxu0 %v169
    %194 = vmatprep.subr.bf16.mxu0 0
    %195 = vmatpush1.bf16.msra.mxu0 0
    %196 = vmatprep.subr.bf16.mxu0 0
    %197 = vmatpush1.bf16.msra.mxu0 0
    %198 = vmatprep.subr.bf16.mxu0 0
    %199 = vmatpush1.bf16.msra.mxu0 0
    %200 = vmatprep.subr.bf16.mxu0 0
    %201 = vmatpush1.bf16.msra.mxu0 0
    %202 = vmatprep.subr.bf16.mxu0 0
    %203 = vmatpush1.bf16.msra.mxu0 0
    %204 = vmatprep.subr.bf16.mxu0 0
    %205 = vmatpush1.bf16.msra.mxu0 0
    %206 = vmatprep.subr.bf16.mxu0 0
    %207 = vmatpush1.bf16.msra.mxu0 0
    %208 = vmatprep.subr.bf16.mxu0 0
    %209 = vmatpush1.bf16.msra.mxu0 0
    %210 = vmatprep.mubr.bf16.mxu0 0
    %211 = vmatmul.mubr.bf16.gmra.mrb[0].mxu0 %v106
    %v212 = vpop.f32.mrb[0].mxu0
    %v213 = vadd.f32 %v128, %v212
    %v214 = vpop.f32.mrb[0].mxu0
    %v215 = vpop.f32.mrb[0].mxu0
    %v216 = vadd.f32 %v128, %v215
    %v217 = vpop.f32.mrb[0].mxu0
    %218 = vdwg.mxu0
    %219 = vst [vmem:[#allocation11] sm:$0xff] %v213
    %220 = vst [vmem:[#allocation11 + $0x8] sm:$0xff] %v216
    // Predicated region
    $region42: #{mlp_forward.5} parent=1 // pred_check
      _
    $region43: #{mlp_forward.5} parent=1 // pred_check_branch
      %222 = sbr.rel (0) target = $region45
    $region44: #{mlp_forward.5} parent=1 // pred_region
      %s224 = ssub.s32 256, 256
      %225 = vsyncadd [#allocation4], %s224
      %s226 = sshll.u32 [#allocation11], 4
      %s227 = int_to_ptr.vmem [resolvable:$true] %s226
      %232 = dma.vmem_to_hbm [thread:$0]  %s227, 256, %s5, [#allocation4], 128, 128, 8
    $region45: #{mlp_forward.5} parent=1 // pred_fallthru
      _
    // Predicated region
    $region46: #{mlp_forward.5} parent=1 // pred_check
      _
    $region47: #{mlp_forward.5} parent=1 // pred_check_branch
      %234 = sbr.rel (0) target = $region49
    $region48: #{mlp_forward.5} parent=1 // pred_region
      %235 = dma.done [#allocation4], 256
    $region49: #{mlp_forward.5} parent=1 // pred_fallthru
      _
    %236 = vsyncpa [#allocation3], 1
    %237 = vsyncpa [#allocation6], 1
    %238 = vsyncpa [#allocation9], 1
    %239 = vsyncpa [#allocation4], 1

</llo_original>
